<compile_context>
chip_gen: v7x
topology: tpu7x:2x2x1
jax: 0.10.0
libtpu: 0.0.40
codegen_flags: <defaults>
</compile_context>

<pallas_src>
import functools

import numpy as np

import jax
import jax.numpy as jnp
from jax.experimental import pallas as pl
from jax.experimental.pallas import tpu as pltpu


def _global_mixing_kernel(x_ref, wqkv_t_ref, wout_ref, bias_ref, mask_ref, o_ref,
                          *, bb, heads, dim_head, compute_dtype, approx_recip,
                          scale, residual):
    # x_ref:      (bb, C, N)              input pixels, channels first (N on lanes)
    # wqkv_t_ref: (C, 3*hidden)           qkv 1x1-conv weight, pre-transposed (lane-dense)
    # wout_ref:   (C, hidden)             output 1x1-conv weight
    # bias_ref:   (C, 1)                  output 1x1-conv bias
    # mask_ref:   (bb*hidden, bb*hidden)  constant block-diag (batch x head) mask
    # o_ref:      (bb, C, N)
    hidden = heads * dim_head
    n = x_ref.shape[-1]
    cd = compute_dtype

    # ---- qkv 1x1 conv for ALL batches in one MXU matmul (K = C, lanes = bb*N).
    # Lane-concat of the batch is a tiny VMEM copy (C x N per batch).
    x_cbn = jnp.concatenate([x_ref[b] for b in range(bb)], axis=1).astype(cd)   # (C, bb*N)
    qkv = jax.lax.dot_general(
        wqkv_t_ref[...].astype(cd), x_cbn,
        (((0,), (0,)), ((), ())),                                               # contract over C
        preferred_element_type=jnp.float32)                                     # (3*hidden, bb*N) f32

    # Sublane-aligned static slices.  q/v drop to the compute dtype right away
    # (shrinks the live f32 set); k stays f32 through the softmax.
    q = qkv[0 * hidden:1 * hidden]
    if scale != 1.0:
        q = q * scale
    q = q.astype(cd)
    k = qkv[1 * hidden:2 * hidden]
    v = qkv[2 * hidden:3 * hidden].astype(cd)

    # ---- Restack batch from lanes to sublanes: (hidden, bb*N) -> (bb*hidden, N)
    # so both attention matmuls present M = K = bb*hidden to the MXU.
    def restack(t):
        return jnp.concatenate([t[:, b * n:(b + 1) * n] for b in range(bb)], axis=0)

    q_s = restack(q)                                                            # (bb*hidden, N) cd
    v_s = restack(v)                                                            # (bb*hidden, N) cd
    k_s = restack(k)                                                            # (bb*hidden, N) f32

    # ---- k = softmax(k, dim=-1): one vectorized pass over all batches & heads
    # (f32 on the VPU/EUP).  Approx reciprocal uses the otherwise-idle EUP slot.
    k_max = jnp.max(k_s, axis=1, keepdims=True)
    k_exp = jnp.exp(k_s - k_max)
    denom = jnp.sum(k_exp, axis=1, keepdims=True)
    inv = pl.reciprocal(denom, approx=True) if approx_recip else 1.0 / denom
    k_sm = (k_exp * inv).astype(cd)                                             # (bb*hidden, N)

    # ---- context^T for all batches & heads in ONE matmul:
    #   ctx[e, d] = sum_n v[e, n] * k_sm[d, n]
    # Cross-head and cross-batch entries are killed by the constant block-diag
    # mask with a single VPU multiply.
    ctx = jax.lax.dot_general(v_s, k_sm, (((1,), (1,)), ((), ())),
                              preferred_element_type=jnp.float32)               # (bb*hidden, bb*hidden)
    ctx = (ctx * mask_ref[...]).astype(cd)

    # ---- out[e, n] = sum_d context[d, e] * q[d, n]: one
    # (bb*hidden, bb*hidden) x (bb*hidden, N) MXU matmul for all batches & heads.
    out_s = jnp.dot(ctx, q_s, preferred_element_type=jnp.float32).astype(cd)    # (bb*hidden, N)

    # ---- to_out 1x1 conv + bias, written straight into the output block.
    wout = wout_ref[...].astype(cd)
    bias = bias_ref[...].astype(jnp.float32)
    for b in range(bb):
        y = jnp.dot(wout, out_s[b * hidden:(b + 1) * hidden],
                    preferred_element_type=jnp.float32) + bias                  # (C, N) f32
        if residual:
            y = y + x_ref[b].astype(jnp.float32)   # fused residual add (free VPU slack)
        o_ref[b] = y.astype(o_ref.dtype)


def global_mixing(x_nchw, w_qkv, w_out, b_out, *, heads, dim_head,
                  compute_dtype=jnp.bfloat16, approx_recip=True, scale=1.0,
                  residual=False, batch_blocks=1, core_parallel=False):
    """Linear-attention global mixing.

    x_nchw: (B, C, H, W); w_qkv: (3*hidden, C, 1, 1); w_out: (C, hidden, 1, 1);
    b_out: (C,).  Returns (B, C, H, W) in x's dtype.

    scale: optional q scaling (diffuser's LinearAttention uses dim_head**-0.5;
           default 1.0 matches the reference below).
    residual: fuse `out + x` into the kernel (Residual(...) wrapper).
    batch_blocks / core_parallel: on v7x set batch_blocks=2, core_parallel=True
           to split the batch across the two TensorCores via CORE_PARALLEL; the
           default is a single fused grid step (best on v5e/v6e).
    """
    B, C, H, W = x_nchw.shape
    N = H * W
    hidden = heads * dim_head
    assert B % batch_blocks == 0, "batch_blocks must divide the batch size"
    bb = B // batch_blocks        # batches per grid step

    # Native dtypes end-to-end: no forced f32 casts at the boundary; NCHW ->
    # (B, C, N) is a pure contiguous reshape (no transpose, no HBM round trip).
    x_bcn = x_nchw.reshape(B, C, N)
    wqkv_t = w_qkv.reshape(3 * hidden, C).T          # (C, 3*hidden): lane-dense weight
    wout = w_out.reshape(C, hidden)                  # (C, hidden)
    bias = b_out.reshape(C, 1)                       # (C, 1)

    # Block-diagonal (batch x head) mask, built with numpy at trace time and fed
    # as a small VMEM input (one VPU multiply in-kernel instead of iota math).
    blk = np.arange(bb * hidden) // dim_head
    mask = jnp.asarray((blk[:, None] == blk[None, :]).astype(np.float32))

    kernel = functools.partial(
        _global_mixing_kernel, bb=bb, heads=heads, dim_head=dim_head,
        compute_dtype=compute_dtype, approx_recip=approx_recip, scale=scale,
        residual=residual)

    # Default: single fused step ("parallel" is a no-op at grid size 1).  On v7x
    # use CORE_PARALLEL with batch_blocks == num TensorCores for a real 2-TC split.
    dim_sem = (pltpu.CORE_PARALLEL,) if core_parallel else ("parallel",)

    # VMEM footprint for these shapes is ~1-2 MiB: no N-tiling, no vmem_limit.
    out_bcn = pl.pallas_call(
        kernel,
        out_shape=jax.ShapeDtypeStruct((B, C, N), x_nchw.dtype),
        grid_spec=pltpu.PrefetchScalarGridSpec(
            num_scalar_prefetch=0,
            grid=(batch_blocks,),
            in_specs=[
                pl.BlockSpec((bb, C, N), lambda i: (i, 0, 0)),
                pl.BlockSpec((C, 3 * hidden), lambda i: (0, 0)),
                pl.BlockSpec((C, hidden), lambda i: (0, 0)),
                pl.BlockSpec((C, 1), lambda i: (0, 0)),
                pl.BlockSpec((bb * hidden, bb * hidden), lambda i: (0, 0)),
            ],
            out_specs=pl.BlockSpec((bb, C, N), lambda i: (i, 0, 0)),
        ),
        compiler_params=pltpu.CompilerParams(dimension_semantics=dim_sem),
    )(x_bcn, wqkv_t, wout, bias, mask)

    return out_bcn.reshape(B, C, H, W)


def global_mixing_ref(x_nchw, w_qkv, w_out, b_out, *, heads, dim_head,
                      scale=1.0, residual=False):
    """Pure-JAX f32 reference matching the PyTorch linear-attention forward."""
    B, C, H, W = x_nchw.shape
    N = H * W
    hidden = heads * dim_head
    x_flat = x_nchw.reshape(B, C, N).astype(jnp.float32)
    qkv = jnp.einsum('oc,bcn->bon', w_qkv.reshape(3 * hidden, C).astype(jnp.float32), x_flat)
    qkv = qkv.reshape(B, 3, heads, dim_head, N)
    q, k, v = qkv[:, 0], qkv[:, 1], qkv[:, 2]                  # (B, heads, d, N)
    q = q * scale
    k = jax.nn.softmax(k, axis=-1)
    context = jnp.einsum('bhdn,bhen->bhde', k, v)
    out = jnp.einsum('bhde,bhdn->bhen', context, q)            # (B, heads, d, N)
    out = out.reshape(B, hidden, N)
    y = jnp.einsum('oc,bcn->bon', w_out.reshape(C, hidden).astype(jnp.float32), out)
    y = y + b_out.astype(jnp.float32)[None, :, None]
    if residual:
        y = y + x_flat
    return y.reshape(B, C, H, W)


if __name__ == "__main__":
    # Small shapes consistent with the module: dim=8 channels, heads=4,
    # dim_head=32 (hidden=128), 16x16 spatial (N=256), batch=2.
    B, DIM, H, W = 2, 8, 16, 16
    HEADS, DIM_HEAD = 4, 32
    HIDDEN = HEADS * DIM_HEAD

    key = jax.random.PRNGKey(0)
    kx, kq, ko, kb = jax.random.split(key, 4)

    x = jax.random.normal(kx, (B, DIM, H, W), dtype=jnp.float32)
    w_qkv = jax.random.normal(kq, (3 * HIDDEN, DIM, 1, 1), dtype=jnp.float32) * 0.1
    w_out = jax.random.normal(ko, (DIM, HIDDEN, 1, 1), dtype=jnp.float32) * 0.1
    b_out = jax.random.normal(kb, (DIM,), dtype=jnp.float32) * 0.1

    y_ref = global_mixing_ref(x, w_qkv, w_out, b_out, heads=HEADS, dim_head=DIM_HEAD)

    # f32-operand path with exact reciprocal: tight numerical check (remaining
    # delta is only matmul accumulation order / MXU precision).
    y_f32 = global_mixing(x, w_qkv, w_out, b_out, heads=HEADS, dim_head=DIM_HEAD,
                          compute_dtype=jnp.float32, approx_recip=False)
    y_f32 = jax.block_until_ready(y_f32)
    assert y_f32.shape == (B, DIM, H, W) and y_f32.dtype == jnp.float32
    assert jnp.allclose(y_f32, y_ref, atol=1e-3, rtol=1e-3), "f32 path mismatch vs reference"

    # Native bf16 path: bf16 inputs/weights in, bf16 out, bf16 MXU operands with
    # f32 accumulation; softmax stays f32 in-kernel.  Input + operand rounding
    # (~2^-9 relative per stage) needs a wider tolerance vs the f32 reference.
    x_bf = x.astype(jnp.bfloat16)
    wq_bf = w_qkv.astype(jnp.bfloat16)
    wo_bf = w_out.astype(jnp.bfloat16)
    bo_bf = b_out.astype(jnp.bfloat16)
    y_bf = global_mixing(x_bf, wq_bf, wo_bf, bo_bf, heads=HEADS, dim_head=DIM_HEAD,
                         compute_dtype=jnp.bfloat16, approx_recip=True)
    y_bf = jax.block_until_ready(y_bf)
    assert y_bf.shape == (B, DIM, H, W) and y_bf.dtype == jnp.bfloat16
    assert jnp.allclose(y_bf.astype(jnp.float32), y_ref, atol=6e-2, rtol=6e-2), \
        "bf16 path mismatch vs reference"

    # Fused-residual path (out + x done inside the kernel).
    y_res = global_mixing(x, w_qkv, w_out, b_out, heads=HEADS, dim_head=DIM_HEAD,
                          compute_dtype=jnp.float32, approx_recip=False, residual=True)
    y_res = jax.block_until_ready(y_res)
    assert jnp.allclose(y_res, y_ref + x, atol=1e-3, rtol=1e-3), "residual path mismatch"

    print("KERNEL_OK")
</pallas_src>

<mosaic_0001>
module attributes {stable_mosaic.version = 11 : i64} {
  func.func @_global_mixing_kernel(%arg0: i32, %arg1: memref<2x8x256xf32, #tpu.memory_space<vmem>>, %arg2: memref<8x384xf32, #tpu.memory_space<vmem>>, %arg3: memref<8x128xf32, #tpu.memory_space<vmem>>, %arg4: memref<8x1xf32, #tpu.memory_space<vmem>>, %arg5: memref<256x256xf32, #tpu.memory_space<vmem>>, %arg6: memref<2x8x256xf32, #tpu.memory_space<vmem>>) attributes {dimension_semantics = [#tpu.dimension_semantics<parallel>], iteration_bounds = array<i64: 1>, scalar_prefetch = 0 : i64, scratch_operands = 0 : i64, tpu.core_type = #tpu.core_type<tc>, window_params = [{transform_indices = @transform_0, window_bounds = array<i64: 2, 8, 256>}, {pipeline_mode = #tpu.pipeline_mode<synchronous>, transform_indices = @transform_1, window_bounds = array<i64: 8, 384>}, {pipeline_mode = #tpu.pipeline_mode<synchronous>, transform_indices = @transform_2, window_bounds = array<i64: 8, 128>}, {pipeline_mode = #tpu.pipeline_mode<synchronous>, transform_indices = @transform_3, window_bounds = array<i64: 8, 1>}, {pipeline_mode = #tpu.pipeline_mode<synchronous>, transform_indices = @transform_4, window_bounds = array<i64: 256, 256>}, {transform_indices = @transform_5, window_bounds = array<i64: 2, 8, 256>}]} {
    %c0 = arith.constant 0 : index
    %c0_0 = arith.constant 0 : index
    %c0_1 = arith.constant 0 : index
    %0 = vector.load %arg1[%c0, %c0_0, %c0_1] : memref<2x8x256xf32, #tpu.memory_space<vmem>>, vector<1x8x256xf32>
    %1 = vector.shape_cast %0 : vector<1x8x256xf32> to vector<8x256xf32>
    %c1 = arith.constant 1 : index
    %c0_2 = arith.constant 0 : index
    %c0_3 = arith.constant 0 : index
    %2 = vector.load %arg1[%c1, %c0_2, %c0_3] : memref<2x8x256xf32, #tpu.memory_space<vmem>>, vector<1x8x256xf32>
    %3 = vector.shape_cast %2 : vector<1x8x256xf32> to vector<8x256xf32>
    %4 = tpu.concatenate %1, %3 in 1 : vector<8x256xf32>, vector<8x256xf32> -> vector<8x512xf32>
    %c0_4 = arith.constant 0 : index
    %c0_5 = arith.constant 0 : index
    %5 = vector.load %arg2[%c0_4, %c0_5] : memref<8x384xf32, #tpu.memory_space<vmem>>, vector<8x384xf32>
    %cst = arith.constant dense<0.000000e+00> : vector<384x512xf32>
    %6 = tpu.matmul %5, %4, %cst {dimension_numbers = #tpu.dot_dimension_numbers<[0], [0], [1], [1], [0, 1, 1, 1], [], []>} : vector<8x384xf32>, vector<8x512xf32>, vector<384x512xf32> -> vector<384x512xf32>
    %7 = vector.extract_strided_slice %6 {offsets = [0, 0], sizes = [128, 512], strides = [1, 1]} : vector<384x512xf32> to vector<128x512xf32>
    %8 = vector.extract_strided_slice %6 {offsets = [128, 0], sizes = [128, 512], strides = [1, 1]} : vector<384x512xf32> to vector<128x512xf32>
    %9 = vector.extract_strided_slice %6 {offsets = [256, 0], sizes = [128, 512], strides = [1, 1]} : vector<384x512xf32> to vector<128x512xf32>
    %10 = vector.extract_strided_slice %7 {offsets = [0, 0], sizes = [128, 256], strides = [1, 1]} : vector<128x512xf32> to vector<128x256xf32>
    %11 = vector.extract_strided_slice %7 {offsets = [0, 256], sizes = [128, 256], strides = [1, 1]} : vector<128x512xf32> to vector<128x256xf32>
    %12 = tpu.concatenate %10, %11 in 0 : vector<128x256xf32>, vector<128x256xf32> -> vector<256x256xf32>
    %13 = vector.extract_strided_slice %9 {offsets = [0, 0], sizes = [128, 256], strides = [1, 1]} : vector<128x512xf32> to vector<128x256xf32>
    %14 = vector.extract_strided_slice %9 {offsets = [0, 256], sizes = [128, 256], strides = [1, 1]} : vector<128x512xf32> to vector<128x256xf32>
    %15 = tpu.concatenate %13, %14 in 0 : vector<128x256xf32>, vector<128x256xf32> -> vector<256x256xf32>
    %16 = vector.extract_strided_slice %8 {offsets = [0, 0], sizes = [128, 256], strides = [1, 1]} : vector<128x512xf32> to vector<128x256xf32>
    %17 = vector.extract_strided_slice %8 {offsets = [0, 256], sizes = [128, 256], strides = [1, 1]} : vector<128x512xf32> to vector<128x256xf32>
    %18 = tpu.concatenate %16, %17 in 0 : vector<128x256xf32>, vector<128x256xf32> -> vector<256x256xf32>
    %cst_6 = arith.constant dense<0xFF800000> : vector<256xf32>
    %19 = vector.multi_reduction <maximumf>, %18, %cst_6 [1] : vector<256x256xf32> to vector<256xf32>
    %20 = vector.shape_cast %19 : vector<256xf32> to vector<256x1xf32>
    %21 = vector.broadcast %20 : vector<256x1xf32> to vector<256x256xf32>
    %22 = arith.subf %18, %21 : vector<256x256xf32>
    %23 = math.exp %22 : vector<256x256xf32>
    %cst_7 = arith.constant dense<0.000000e+00> : vector<256xf32>
    %24 = vector.multi_reduction <add>, %23, %cst_7 [1] : vector<256x256xf32> to vector<256xf32>
    %25 = vector.shape_cast %24 : vector<256xf32> to vector<256x1xf32>
    %cst_8 = arith.constant 1.000000e+00 : f32
    %26 = vector.broadcast %cst_8 : f32 to vector<256x1xf32>
    %27 = arith.divf %26, %25 : vector<256x1xf32>
    %28 = vector.broadcast %27 : vector<256x1xf32> to vector<256x256xf32>
    %29 = arith.mulf %23, %28 : vector<256x256xf32>
    %cst_9 = arith.constant dense<0.000000e+00> : vector<256x256xf32>
    %30 = tpu.matmul %15, %29, %cst_9 {dimension_numbers = #tpu.dot_dimension_numbers<[1], [1], [0], [0], [0, 0, 1, 0], [], []>} : vector<256x256xf32>, vector<256x256xf32>, vector<256x256xf32> -> vector<256x256xf32>
    %c0_10 = arith.constant 0 : index
    %c0_11 = arith.constant 0 : index
    %31 = vector.load %arg5[%c0_10, %c0_11] : memref<256x256xf32, #tpu.memory_space<vmem>>, vector<256x256xf32>
    %32 = arith.mulf %30, %31 : vector<256x256xf32>
    %cst_12 = arith.constant dense<0.000000e+00> : vector<256x256xf32>
    %33 = tpu.matmul %32, %12, %cst_12 {dimension_numbers = #tpu.dot_dimension_numbers<[1], [0], [0], [1], [0, 0, 1, 1], [], []>} : vector<256x256xf32>, vector<256x256xf32>, vector<256x256xf32> -> vector<256x256xf32>
    %c0_13 = arith.constant 0 : index
    %c0_14 = arith.constant 0 : index
    %34 = vector.load %arg3[%c0_13, %c0_14] : memref<8x128xf32, #tpu.memory_space<vmem>>, vector<8x128xf32>
    %c0_15 = arith.constant 0 : index
    %c0_16 = arith.constant 0 : index
    %35 = vector.load %arg4[%c0_15, %c0_16] : memref<8x1xf32, #tpu.memory_space<vmem>>, vector<8x1xf32>
    %36 = vector.extract_strided_slice %33 {offsets = [0, 0], sizes = [128, 256], strides = [1, 1]} : vector<256x256xf32> to vector<128x256xf32>
    %cst_17 = arith.constant dense<0.000000e+00> : vector<8x256xf32>
    %37 = tpu.matmul %34, %36, %cst_17 {dimension_numbers = #tpu.dot_dimension_numbers<[1], [0], [0], [1], [0, 0, 1, 1], [], []>} : vector<8x128xf32>, vector<128x256xf32>, vector<8x256xf32> -> vector<8x256xf32>
    %38 = vector.broadcast %35 : vector<8x1xf32> to vector<8x256xf32>
    %39 = arith.addf %37, %38 : vector<8x256xf32>
    %c0_18 = arith.constant 0 : index
    %c0_19 = arith.constant 0 : index
    %c0_20 = arith.constant 0 : index
    %40 = vector.load %arg6[%c0_18, %c0_19, %c0_20] : memref<2x8x256xf32, #tpu.memory_space<vmem>>, vector<1x8x256xf32>
    %41 = vector.shape_cast %40 : vector<1x8x256xf32> to vector<8x256xf32>
    %42 = vector.shape_cast %39 : vector<8x256xf32> to vector<1x8x256xf32>
    tpu.vector_store %arg6[%c0_18, %c0_19, %c0_20], %42 {strides = array<i32>} : memref<2x8x256xf32, #tpu.memory_space<vmem>>, vector<1x8x256xf32>,
    %43 = vector.extract_strided_slice %33 {offsets = [128, 0], sizes = [128, 256], strides = [1, 1]} : vector<256x256xf32> to vector<128x256xf32>
    %cst_21 = arith.constant dense<0.000000e+00> : vector<8x256xf32>
    %44 = tpu.matmul %34, %43, %cst_21 {dimension_numbers = #tpu.dot_dimension_numbers<[1], [0], [0], [1], [0, 0, 1, 1], [], []>} : vector<8x128xf32>, vector<128x256xf32>, vector<8x256xf32> -> vector<8x256xf32>
    %45 = vector.broadcast %35 : vector<8x1xf32> to vector<8x256xf32>
    %46 = arith.addf %44, %45 : vector<8x256xf32>
    %c1_22 = arith.constant 1 : index
    %c0_23 = arith.constant 0 : index
    %c0_24 = arith.constant 0 : index
    %47 = vector.load %arg6[%c1_22, %c0_23, %c0_24] : memref<2x8x256xf32, #tpu.memory_space<vmem>>, vector<1x8x256xf32>
    %48 = vector.shape_cast %47 : vector<1x8x256xf32> to vector<8x256xf32>
    %49 = vector.shape_cast %46 : vector<8x256xf32> to vector<1x8x256xf32>
    tpu.vector_store %arg6[%c1_22, %c0_23, %c0_24], %49 {strides = array<i32>} : memref<2x8x256xf32, #tpu.memory_space<vmem>>, vector<1x8x256xf32>,
    return
  }
  func.func @transform_0(%arg0: i32) -> (i32, i32, i32) {
    %c0_i32 = arith.constant 0 : i32
    %c0_i32_0 = arith.constant 0 : i32
    %c0_i32_1 = arith.constant 0 : i32
    return %arg0, %c0_i32, %c0_i32_0 : i32, i32, i32
  }
  func.func @transform_1(%arg0: i32) -> (i32, i32) {
    %c0_i32 = arith.constant 0 : i32
    %c0_i32_0 = arith.constant 0 : i32
    %c0_i32_1 = arith.constant 0 : i32
    return %c0_i32, %c0_i32_0 : i32, i32
  }
  func.func @transform_2(%arg0: i32) -> (i32, i32) {
    %c0_i32 = arith.constant 0 : i32
    %c0_i32_0 = arith.constant 0 : i32
    %c0_i32_1 = arith.constant 0 : i32
    return %c0_i32, %c0_i32_0 : i32, i32
  }
  func.func @transform_3(%arg0: i32) -> (i32, i32) {
    %c0_i32 = arith.constant 0 : i32
    %c0_i32_0 = arith.constant 0 : i32
    %c0_i32_1 = arith.constant 0 : i32
    return %c0_i32, %c0_i32_0 : i32, i32
  }
  func.func @transform_4(%arg0: i32) -> (i32, i32) {
    %c0_i32 = arith.constant 0 : i32
    %c0_i32_0 = arith.constant 0 : i32
    %c0_i32_1 = arith.constant 0 : i32
    return %c0_i32, %c0_i32_0 : i32, i32
  }
  func.func @transform_5(%arg0: i32) -> (i32, i32, i32) {
    %c0_i32 = arith.constant 0 : i32
    %c0_i32_0 = arith.constant 0 : i32
    %c0_i32_1 = arith.constant 0 : i32
    return %arg0, %c0_i32, %c0_i32_0 : i32, i32, i32
  }
}

</mosaic_0001>

<llo_original>
// kernel: tpu_custom_call.1
$region0: #{tpu_custom_call.1}
  #allocation0 [shape = 'u32[]', space=smem, size = 0x4, offset = 0x4, fixed_abs, tag = 'smem constant byte address 0x4 - core index']
  #allocation1 [shape = 'u32[144,128]{1,0:T(1,128)}', space=vmem, size = 0x12000, scoped, tag = 'internal scratch']
  %s0 = inlined_call_operand.hbm [shape: f32[2,8,256], index: 0, kind: input, shape index: {}]
  %s1 = inlined_call_operand.hbm [shape: f32[8,384], index: 1, kind: input, shape index: {}]
  %s2 = inlined_call_operand.vmem [shape: f32[8,128], index: 2, kind: input, shape index: {}]
  %s3 = inlined_call_operand.vmem [shape: f32[8,1], index: 3, kind: input, shape index: {}]
  %s4 = inlined_call_operand.hbm [shape: f32[256,256], index: 4, kind: input, shape index: {}]
  %s5 = inlined_call_operand.hbm [shape: f32[2,8,256], index: 5, kind: output, shape index: {}]
  %s6 = sld [smem:[#allocation0]]
  $region42: #{tpu_custom_call.1} parent=0
    _
  %s8 = ssub.s32 1, %s6
  %s9 = scalar_select 0, %s8, %s6
  $region1: #{tpu_custom_call.1} parent=0
    #allocation2 [shape = 'u8[16384]{0}', space=vmem, size = 0x4000, scoped, tag = 'input window, operand 0, single buffered']
    #allocation3 [shape = 's32[1]{0}', space=sflag, size = 0x4, scoped, tag = 'scoped memory for tpu_custom_call.1']
    #allocation4 [shape = 's32[1]{0}', space=sflag, size = 0x4, scoped, tag = 'scoped memory for tpu_custom_call.1']
    #allocation5 [shape = 'u8[12288]{0}', space=vmem, size = 0x3000, scoped, tag = 'input window, operand 1, single buffered']
    #allocation6 [shape = 's32[1]{0}', space=sflag, size = 0x4, scoped, tag = 'scoped memory for tpu_custom_call.1']
    #allocation7 [shape = 'u8[262144]{0}', space=vmem, size = 0x40000, scoped, tag = 'input window, operand 4, single buffered']
    #allocation8 [shape = 'u8[16384]{0}', space=vmem, size = 0x4000, scoped, tag = 'output window, operand 0, single buffered']
    %10 = vsyncpa [#allocation3], 0
    %11 = vsyncpa [#allocation6], 0
    %12 = vsyncpa [#allocation4], 0
    // Predicated region
    $region2: #{tpu_custom_call.1} parent=1 // pred_check
      _
    $region3: #{tpu_custom_call.1} parent=1 // pred_check_branch
      %14 = sbr.rel (0) target = $region5
    $region4: #{tpu_custom_call.1} parent=1 // pred_region
      %s16 = ssub.s32 512, 512
      %17 = vsyncadd [#allocation3], %s16
      %s18 = sshll.u32 [#allocation2], 4
      %s19 = int_to_ptr.vmem [resolvable:$true] %s18
      %24 = dma.hbm_to_vmem [thread:$0]  %s0, 512, %s19, [#allocation3], 256, 256, 16
    $region5: #{tpu_custom_call.1} parent=1 // pred_fallthru
      _
    // Predicated region
    $region6: #{tpu_custom_call.1} parent=1 // pred_check
      _
    $region7: #{tpu_custom_call.1} parent=1 // pred_check_branch
      %26 = sbr.rel (0) target = $region9
    $region8: #{tpu_custom_call.1} parent=1 // pred_region
      %s28 = ssub.s32 384, 384
      %29 = vsyncadd [#allocation6], %s28
      %s31 = sshll.u32 [#allocation5], 4
      %s32 = int_to_ptr.vmem [resolvable:$true] %s31
      %34 = dma.hbm_to_vmem [thread:$0]  %s1, 384, %s32, [#allocation6]
    $region9: #{tpu_custom_call.1} parent=1 // pred_fallthru
      _
    // Predicated region
    $region10: #{tpu_custom_call.1} parent=1 // pred_check
      _
    $region11: #{tpu_custom_call.1} parent=1 // pred_check_branch
      %36 = sbr.rel (0) target = $region13
    $region12: #{tpu_custom_call.1} parent=1 // pred_region
      _
    $region13: #{tpu_custom_call.1} parent=1 // pred_fallthru
      _
    // Predicated region
    $region14: #{tpu_custom_call.1} parent=1 // pred_check
      _
    $region15: #{tpu_custom_call.1} parent=1 // pred_check_branch
      %38 = sbr.rel (0) target = $region17
    $region16: #{tpu_custom_call.1} parent=1 // pred_region
      _
    $region17: #{tpu_custom_call.1} parent=1 // pred_fallthru
      _
    // Predicated region
    $region18: #{tpu_custom_call.1} parent=1 // pred_check
      _
    $region19: #{tpu_custom_call.1} parent=1 // pred_check_branch
      %40 = sbr.rel (0) target = $region21
    $region20: #{tpu_custom_call.1} parent=1 // pred_region
      %s42 = ssub.s32 8192, 8192
      %43 = vsyncadd [#allocation6], %s42
      %s44 = sshll.u32 [#allocation7], 4
      %s45 = int_to_ptr.vmem [resolvable:$true] %s44
      %50 = dma.hbm_to_vmem [thread:$0]  %s4, 8192, %s45, [#allocation6], 256, 256, 16
    $region21: #{tpu_custom_call.1} parent=1 // pred_fallthru
      _
    // Predicated region
    $region22: #{tpu_custom_call.1} parent=1 // pred_check
      _
    $region23: #{tpu_custom_call.1} parent=1 // pred_check_branch
      %52 = sbr.rel (0) target = $region25
    $region24: #{tpu_custom_call.1} parent=1 // pred_region
      %53 = dma.done [#allocation3], 512
    $region25: #{tpu_custom_call.1} parent=1 // pred_fallthru
      _
    // Predicated region
    $region26: #{tpu_custom_call.1} parent=1 // pred_check
      _
    $region27: #{tpu_custom_call.1} parent=1 // pred_check_branch
      %55 = sbr.rel (0) target = $region29
    $region28: #{tpu_custom_call.1} parent=1 // pred_region
      %56 = dma.done [#allocation6], 384
    $region29: #{tpu_custom_call.1} parent=1 // pred_fallthru
      _
    // Predicated region
    $region30: #{tpu_custom_call.1} parent=1 // pred_check
      _
    $region31: #{tpu_custom_call.1} parent=1 // pred_check_branch
      %58 = sbr.rel (0) target = $region33
    $region32: #{tpu_custom_call.1} parent=1 // pred_region
      %59 = dma.done [#allocation6], 8192
    $region33: #{tpu_custom_call.1} parent=1 // pred_fallthru
      _
    %v60 = vld [vmem:[#allocation2] sm:$0xff]
    %v61 = vld [vmem:[#allocation2 + $0x8] sm:$0xff]
    %s62 = scalar_lea.vmem [#allocation2], 16
    %v63 = vld [vmem:[%s62] sm:$0xff]
    %v64 = vld [vmem:[%s62 + $0x8] sm:$0xff]
    %v65 = vld [vmem:[#allocation5] sm:$0xff]
    %v66 = vld [vmem:[#allocation5 + $0x8] sm:$0xff]
    %v67 = vld [vmem:[#allocation5 + $0x10] sm:$0xff]
    %68 = vxpose.xlu0.b32.start [1/16] %v65, 128
    %69 = vxpose.xlu0.b32.cont [2/16] 0.0, 128
    %70 = vxpose.xlu0.b32.cont [3/16] 0.0, 128
    %71 = vxpose.xlu0.b32.cont [4/16] 0.0, 128
    %72 = vxpose.xlu0.b32.cont [5/16] 0.0, 128
    %73 = vxpose.xlu0.b32.cont [6/16] 0.0, 128
    %74 = vxpose.xlu0.b32.cont [7/16] 0.0, 128
    %75 = vxpose.xlu0.b32.cont [8/16] 0.0, 128
    %76 = vxpose.xlu0.b32.cont [9/16] 0.0, 128
    %77 = vxpose.xlu0.b32.cont [10/16] 0.0, 128
    %78 = vxpose.xlu0.b32.cont [11/16] 0.0, 128
    %79 = vxpose.xlu0.b32.cont [12/16] 0.0, 128
    %80 = vxpose.xlu0.b32.cont [13/16] 0.0, 128
    %81 = vxpose.xlu0.b32.cont [14/16] 0.0, 128
    %82 = vxpose.xlu0.b32.cont [15/16] 0.0, 128
    %83 = vxpose.xlu0.b32.end [16/16] 0.0, 128
    %v84 = vpop.trf.xlu0
    %v85 = vpop.trf.xlu0
    %v86 = vpop.trf.xlu0
    %v87 = vpop.trf.xlu0
    %v88 = vpop.trf.xlu0
    %v89 = vpop.trf.xlu0
    %v90 = vpop.trf.xlu0
    %v91 = vpop.trf.xlu0
    %v92 = vpop.trf.xlu0
    %v93 = vpop.trf.xlu0
    %v94 = vpop.trf.xlu0
    %v95 = vpop.trf.xlu0
    %v96 = vpop.trf.xlu0
    %v97 = vpop.trf.xlu0
    %v98 = vpop.trf.xlu0
    %v99 = vpop.trf.xlu0
    %100 = vxpose.xlu0.b32.start [1/16] %v66, 128
    %101 = vxpose.xlu0.b32.cont [2/16] 0.0, 128
    %102 = vxpose.xlu0.b32.cont [3/16] 0.0, 128
    %103 = vxpose.xlu0.b32.cont [4/16] 0.0, 128
    %104 = vxpose.xlu0.b32.cont [5/16] 0.0, 128
    %105 = vxpose.xlu0.b32.cont [6/16] 0.0, 128
    %106 = vxpose.xlu0.b32.cont [7/16] 0.0, 128
    %107 = vxpose.xlu0.b32.cont [8/16] 0.0, 128
    %108 = vxpose.xlu0.b32.cont [9/16] 0.0, 128
    %109 = vxpose.xlu0.b32.cont [10/16] 0.0, 128
    %110 = vxpose.xlu0.b32.cont [11/16] 0.0, 128
    %111 = vxpose.xlu0.b32.cont [12/16] 0.0, 128
    %112 = vxpose.xlu0.b32.cont [13/16] 0.0, 128
    %113 = vxpose.xlu0.b32.cont [14/16] 0.0, 128
    %114 = vxpose.xlu0.b32.cont [15/16] 0.0, 128
    %115 = vxpose.xlu0.b32.end [16/16] 0.0, 128
    %v116 = vpop.trf.xlu0
    %v117 = vpop.trf.xlu0
    %v118 = vpop.trf.xlu0
    %v119 = vpop.trf.xlu0
    %v120 = vpop.trf.xlu0
    %v121 = vpop.trf.xlu0
    %v122 = vpop.trf.xlu0
    %v123 = vpop.trf.xlu0
    %v124 = vpop.trf.xlu0
    %v125 = vpop.trf.xlu0
    %v126 = vpop.trf.xlu0
    %v127 = vpop.trf.xlu0
    %v128 = vpop.trf.xlu0
    %v129 = vpop.trf.xlu0
    %v130 = vpop.trf.xlu0
    %v131 = vpop.trf.xlu0
    %132 = vxpose.xlu0.b32.start [1/16] %v67, 128
    %133 = vxpose.xlu0.b32.cont [2/16] 0.0, 128
    %134 = vxpose.xlu0.b32.cont [3/16] 0.0, 128
    %135 = vxpose.xlu0.b32.cont [4/16] 0.0, 128
    %136 = vxpose.xlu0.b32.cont [5/16] 0.0, 128
    %137 = vxpose.xlu0.b32.cont [6/16] 0.0, 128
    %138 = vxpose.xlu0.b32.cont [7/16] 0.0, 128
    %139 = vxpose.xlu0.b32.cont [8/16] 0.0, 128
    %140 = vxpose.xlu0.b32.cont [9/16] 0.0, 128
    %141 = vxpose.xlu0.b32.cont [10/16] 0.0, 128
    %142 = vxpose.xlu0.b32.cont [11/16] 0.0, 128
    %143 = vxpose.xlu0.b32.cont [12/16] 0.0, 128
    %144 = vxpose.xlu0.b32.cont [13/16] 0.0, 128
    %145 = vxpose.xlu0.b32.cont [14/16] 0.0, 128
    %146 = vxpose.xlu0.b32.cont [15/16] 0.0, 128
    %147 = vxpose.xlu0.b32.end [16/16] 0.0, 128
    %v148 = vpop.trf.xlu0
    %v149 = vpop.trf.xlu0
    %v150 = vpop.trf.xlu0
    %v151 = vpop.trf.xlu0
    %v152 = vpop.trf.xlu0
    %v153 = vpop.trf.xlu0
    %v154 = vpop.trf.xlu0
    %v155 = vpop.trf.xlu0
    %v156 = vpop.trf.xlu0
    %v157 = vpop.trf.xlu0
    %v158 = vpop.trf.xlu0
    %v159 = vpop.trf.xlu0
    %v160 = vpop.trf.xlu0
    %v161 = vpop.trf.xlu0
    %v162 = vpop.trf.xlu0
    %v163 = vpop.trf.xlu0
    %vm164 = vcmask 64512
    %v166 = vsel %vm164, %v84, 0
    %v169 = vsel %vm164, %v85, 0
    %v172 = vsel %vm164, %v86, 0
    %v175 = vsel %vm164, %v87, 0
    %v178 = vsel %vm164, %v88, 0
    %v181 = vsel %vm164, %v89, 0
    %v184 = vsel %vm164, %v90, 0
    %v187 = vsel %vm164, %v91, 0
    %v190 = vsel %vm164, %v92, 0
    %v193 = vsel %vm164, %v93, 0
    %v196 = vsel %vm164, %v94, 0
    %v199 = vsel %vm164, %v95, 0
    %v202 = vsel %vm164, %v96, 0
    %v205 = vsel %vm164, %v97, 0
    %v208 = vsel %vm164, %v98, 0
    %v211 = vsel %vm164, %v99, 0
    %v214 = vsel %vm164, %v116, 0
    %v217 = vsel %vm164, %v117, 0
    %v220 = vsel %vm164, %v118, 0
    %v223 = vsel %vm164, %v119, 0
    %v226 = vsel %vm164, %v120, 0
    %v229 = vsel %vm164, %v121, 0
    %v232 = vsel %vm164, %v122, 0
    %v235 = vsel %vm164, %v123, 0
    %v238 = vsel %vm164, %v124, 0
    %v241 = vsel %vm164, %v125, 0
    %v244 = vsel %vm164, %v126, 0
    %v247 = vsel %vm164, %v127, 0
    %v250 = vsel %vm164, %v128, 0
    %v253 = vsel %vm164, %v129, 0
    %v256 = vsel %vm164, %v130, 0
    %v259 = vsel %vm164, %v131, 0
    %v262 = vsel %vm164, %v148, 0
    %v265 = vsel %vm164, %v149, 0
    %v268 = vsel %vm164, %v150, 0
    %v271 = vsel %vm164, %v151, 0
    %v274 = vsel %vm164, %v152, 0
    %v277 = vsel %vm164, %v153, 0
    %v280 = vsel %vm164, %v154, 0
    %v283 = vsel %vm164, %v155, 0
    %v286 = vsel %vm164, %v156, 0
    %v289 = vsel %vm164, %v157, 0
    %v292 = vsel %vm164, %v158, 0
    %v295 = vsel %vm164, %v159, 0
    %v298 = vsel %vm164, %v160, 0
    %v301 = vsel %vm164, %v161, 0
    %v304 = vsel %vm164, %v162, 0
    %v307 = vsel %vm164, %v163, 0
    %309 = vmatprep.subr.mxu0 %v61
    %310 = vmatpush1.msra.mxu0 %v60
    %311 = vmatprep.subr.mxu0 0.0
    %312 = vmatpush1.msra.mxu0 0.0
    %313 = vmatprep.subr.mxu0 0.0
    %314 = vmatpush1.msra.mxu0 0.0
    %315 = vmatprep.subr.mxu0 0.0
    %316 = vmatpush1.msra.mxu0 0.0
    %317 = vmatprep.subr.mxu0 0.0
    %318 = vmatpush1.msra.mxu0 0.0
    %319 = vmatprep.subr.mxu0 0.0
    %320 = vmatpush1.msra.mxu0 0.0
    %321 = vmatprep.subr.mxu0 0.0
    %322 = vmatpush1.msra.mxu0 0.0
    %323 = vmatprep.subr.mxu0 0.0
    %324 = vmatpush1.msra.mxu0 0.0
    %325 = vmatprep.subr.mxu0 0.0
    %326 = vmatpush1.msra.mxu0 0.0
    %327 = vmatprep.subr.mxu0 0.0
    %328 = vmatpush1.msra.mxu0 0.0
    %329 = vmatprep.subr.mxu0 0.0
    %330 = vmatpush1.msra.mxu0 0.0
    %331 = vmatprep.subr.mxu0 0.0
    %332 = vmatpush1.msra.mxu0 0.0
    %333 = vmatprep.subr.mxu0 0.0
    %334 = vmatpush1.msra.mxu0 0.0
    %335 = vmatprep.subr.mxu0 0.0
    %336 = vmatpush1.msra.mxu0 0.0
    %337 = vmatprep.subr.mxu0 0.0
    %338 = vmatpush1.msra.mxu0 0.0
    %339 = vmatprep.subr.mxu0 0.0
    %340 = vmatpush1.msra.mxu0 0.0
    %341 = vmatprep.subr.mxu0 0.0
    %342 = vmatpush1.msra.mxu0 0.0
    %343 = vmatprep.subr.mxu0 0.0
    %344 = vmatpush1.msra.mxu0 0.0
    %345 = vmatprep.subr.mxu0 0.0
    %346 = vmatpush1.msra.mxu0 0.0
    %347 = vmatprep.subr.mxu0 0.0
    %348 = vmatpush1.msra.mxu0 0.0
    %349 = vmatprep.subr.mxu0 0.0
    %350 = vmatpush1.msra.mxu0 0.0
    %351 = vmatprep.subr.mxu0 0.0
    %352 = vmatpush1.msra.mxu0 0.0
    %353 = vmatprep.subr.mxu0 0.0
    %354 = vmatpush1.msra.mxu0 0.0
    %355 = vmatprep.subr.mxu0 0.0
    %356 = vmatpush1.msra.mxu0 0.0
    %357 = vmatprep.subr.mxu0 0.0
    %358 = vmatpush1.msra.mxu0 0.0
    %359 = vmatprep.subr.mxu0 0.0
    %360 = vmatpush1.msra.mxu0 0.0
    %361 = vmatprep.subr.mxu0 0.0
    %362 = vmatpush1.msra.mxu0 0.0
    %363 = vmatprep.subr.mxu0 0.0
    %364 = vmatpush1.msra.mxu0 0.0
    %365 = vmatprep.subr.mxu0 0.0
    %366 = vmatpush1.msra.mxu0 0.0
    %367 = vmatprep.subr.mxu0 0.0
    %368 = vmatpush1.msra.mxu0 0.0
    %369 = vmatprep.subr.mxu0 0.0
    %370 = vmatpush1.msra.mxu0 0.0
    %371 = vmatprep.subr.mxu0 0.0
    %372 = vmatpush1.msra.mxu0 0.0
    %373 = vmatprep.mubr.f32.mxu0 0.0
    %374 = vmatmul.mubr.f32.gmra.mrb[0].mxu0 %v166
    %v375 = vpop.f32.mrb[0].mxu0
    %v376 = vadd.f32 0.0, %v375
    %v377 = vpop.f32.mrb[0].mxu0
    %v378 = vadd.f32 0.0, %v377
    %379 = vmatprep.mubr.f32.mxu0 0.0
    %380 = vmatmul.mubr.f32.gmra.mrb[0].mxu0 %v169
    %v381 = vpop.f32.mrb[0].mxu0
    %v382 = vadd.f32 0.0, %v381
    %v383 = vpop.f32.mrb[0].mxu0
    %v384 = vadd.f32 0.0, %v383
    %385 = vmatprep.mubr.f32.mxu0 0.0
    %386 = vmatmul.mubr.f32.gmra.mrb[0].mxu0 %v172
    %v387 = vpop.f32.mrb[0].mxu0
    %v388 = vadd.f32 0.0, %v387
    %v389 = vpop.f32.mrb[0].mxu0
    %v390 = vadd.f32 0.0, %v389
    %391 = vmatprep.mubr.f32.mxu0 0.0
    %392 = vmatmul.mubr.f32.gmra.mrb[0].mxu0 %v175
    %v393 = vpop.f32.mrb[0].mxu0
    %v394 = vadd.f32 0.0, %v393
    %v395 = vpop.f32.mrb[0].mxu0
    %v396 = vadd.f32 0.0, %v395
    %397 = vmatprep.mubr.f32.mxu0 0.0
    %398 = vmatmul.mubr.f32.gmra.mrb[0].mxu0 %v178
    %v399 = vpop.f32.mrb[0].mxu0
    %v400 = vadd.f32 0.0, %v399
    %v401 = vpop.f32.mrb[0].mxu0
    %v402 = vadd.f32 0.0, %v401
    %403 = vmatprep.mubr.f32.mxu0 0.0
    %404 = vmatmul.mubr.f32.gmra.mrb[0].mxu0 %v181
    %v405 = vpop.f32.mrb[0].mxu0
    %v406 = vadd.f32 0.0, %v405
    %v407 = vpop.f32.mrb[0].mxu0
    %v408 = vadd.f32 0.0, %v407
    %409 = vmatprep.mubr.f32.mxu0 0.0
    %410 = vmatmul.mubr.f32.gmra.mrb[0].mxu0 %v184
    %v411 = vpop.f32.mrb[0].mxu0
    %v412 = vadd.f32 0.0, %v411
    %v413 = vpop.f32.mrb[0].mxu0
    %v414 = vadd.f32 0.0, %v413
    %415 = vmatprep.mubr.f32.mxu0 0.0
    %416 = vmatmul.mubr.f32.gmra.mrb[0].mxu0 %v187
    %v417 = vpop.f32.mrb[0].mxu0
    %v418 = vadd.f32 0.0, %v417
    %v419 = vpop.f32.mrb[0].mxu0
    %v420 = vadd.f32 0.0, %v419
    %421 = vmatprep.mubr.f32.mxu0 0.0
    %422 = vmatmul.mubr.f32.gmra.mrb[0].mxu0 %v190
    %v423 = vpop.f32.mrb[0].mxu0
    %v424 = vadd.f32 0.0, %v423
    %v425 = vpop.f32.mrb[0].mxu0
    %v426 = vadd.f32 0.0, %v425
    %427 = vmatprep.mubr.f32.mxu0 0.0
    %428 = vmatmul.mubr.f32.gmra.mrb[0].mxu0 %v193
    %v429 = vpop.f32.mrb[0].mxu0
    %v430 = vadd.f32 0.0, %v429
    %v431 = vpop.f32.mrb[0].mxu0
    %v432 = vadd.f32 0.0, %v431
    %433 = vmatprep.mubr.f32.mxu0 0.0
    %434 = vmatmul.mubr.f32.gmra.mrb[0].mxu0 %v196
    %v435 = vpop.f32.mrb[0].mxu0
    %v436 = vadd.f32 0.0, %v435
    %v437 = vpop.f32.mrb[0].mxu0
    %v438 = vadd.f32 0.0, %v437
    %439 = vmatprep.mubr.f32.mxu0 0.0
    %440 = vmatmul.mubr.f32.gmra.mrb[0].mxu0 %v199
    %v441 = vpop.f32.mrb[0].mxu0
    %v442 = vadd.f32 0.0, %v441
    %v443 = vpop.f32.mrb[0].mxu0
    %v444 = vadd.f32 0.0, %v443
    %445 = vmatprep.mubr.f32.mxu0 0.0
    %446 = vmatmul.mubr.f32.gmra.mrb[0].mxu0 %v202
    %v447 = vpop.f32.mrb[0].mxu0
    %v448 = vadd.f32 0.0, %v447
    %v449 = vpop.f32.mrb[0].mxu0
    %v450 = vadd.f32 0.0, %v449
    %451 = vmatprep.mubr.f32.mxu0 0.0
    %452 = vmatmul.mubr.f32.gmra.mrb[0].mxu0 %v205
    %v453 = vpop.f32.mrb[0].mxu0
    %v454 = vadd.f32 0.0, %v453
    %v455 = vpop.f32.mrb[0].mxu0
    %v456 = vadd.f32 0.0, %v455
    %457 = vmatprep.mubr.f32.mxu0 0.0
    %458 = vmatmul.mubr.f32.gmra.mrb[0].mxu0 %v208
    %v459 = vpop.f32.mrb[0].mxu0
    %v460 = vadd.f32 0.0, %v459
    %v461 = vpop.f32.mrb[0].mxu0
    %v462 = vadd.f32 0.0, %v461
    %463 = vmatprep.mubr.f32.mxu0 0.0
    %464 = vmatmul.mubr.f32.gmra.mrb[0].mxu0 %v211
    %v465 = vpop.f32.mrb[0].mxu0
    %v466 = vadd.f32 0.0, %v465
    %v467 = vpop.f32.mrb[0].mxu0
    %v468 = vadd.f32 0.0, %v467
    %469 = vmatprep.mubr.f32.mxu0 0.0
    %470 = vmatmul.mubr.f32.gmra.mrb[0].mxu0 %v214
    %v471 = vpop.f32.mrb[0].mxu0
    %v472 = vadd.f32 0.0, %v471
    %v473 = vpop.f32.mrb[0].mxu0
    %v474 = vadd.f32 0.0, %v473
    %475 = vmatprep.mubr.f32.mxu0 0.0
    %476 = vmatmul.mubr.f32.gmra.mrb[0].mxu0 %v217
    %v477 = vpop.f32.mrb[0].mxu0
    %v478 = vadd.f32 0.0, %v477
    %v479 = vpop.f32.mrb[0].mxu0
    %v480 = vadd.f32 0.0, %v479
    %481 = vmatprep.mubr.f32.mxu0 0.0
    %482 = vmatmul.mubr.f32.gmra.mrb[0].mxu0 %v220
    %v483 = vpop.f32.mrb[0].mxu0
    %v484 = vadd.f32 0.0, %v483
    %v485 = vpop.f32.mrb[0].mxu0
    %v486 = vadd.f32 0.0, %v485
    %487 = vmatprep.mubr.f32.mxu0 0.0
    %488 = vmatmul.mubr.f32.gmra.mrb[0].mxu0 %v223
    %v489 = vpop.f32.mrb[0].mxu0
    %v490 = vadd.f32 0.0, %v489
    %v491 = vpop.f32.mrb[0].mxu0
    %v492 = vadd.f32 0.0, %v491
    %493 = vmatprep.mubr.f32.mxu0 0.0
    %494 = vmatmul.mubr.f32.gmra.mrb[0].mxu0 %v226
    %v495 = vpop.f32.mrb[0].mxu0
    %v496 = vadd.f32 0.0, %v495
    %v497 = vpop.f32.mrb[0].mxu0
    %v498 = vadd.f32 0.0, %v497
    %499 = vmatprep.mubr.f32.mxu0 0.0
    %500 = vmatmul.mubr.f32.gmra.mrb[0].mxu0 %v229
    %v501 = vpop.f32.mrb[0].mxu0
    %v502 = vadd.f32 0.0, %v501
    %v503 = vpop.f32.mrb[0].mxu0
    %v504 = vadd.f32 0.0, %v503
    %505 = vmatprep.mubr.f32.mxu0 0.0
    %506 = vmatmul.mubr.f32.gmra.mrb[0].mxu0 %v232
    %v507 = vpop.f32.mrb[0].mxu0
    %v508 = vadd.f32 0.0, %v507
    %v509 = vpop.f32.mrb[0].mxu0
    %v510 = vadd.f32 0.0, %v509
    %511 = vmatprep.mubr.f32.mxu0 0.0
    %512 = vmatmul.mubr.f32.gmra.mrb[0].mxu0 %v235
    %v513 = vpop.f32.mrb[0].mxu0
    %v514 = vadd.f32 0.0, %v513
    %v515 = vpop.f32.mrb[0].mxu0
    %v516 = vadd.f32 0.0, %v515
    %517 = vmatprep.mubr.f32.mxu0 0.0
    %518 = vmatmul.mubr.f32.gmra.mrb[0].mxu0 %v238
    %v519 = vpop.f32.mrb[0].mxu0
    %v520 = vadd.f32 0.0, %v519
    %v521 = vpop.f32.mrb[0].mxu0
    %v522 = vadd.f32 0.0, %v521
    %523 = vmatprep.mubr.f32.mxu0 0.0
    %524 = vmatmul.mubr.f32.gmra.mrb[0].mxu0 %v241
    %v525 = vpop.f32.mrb[0].mxu0
    %v526 = vadd.f32 0.0, %v525
    %v527 = vpop.f32.mrb[0].mxu0
    %v528 = vadd.f32 0.0, %v527
    %529 = vmatprep.mubr.f32.mxu0 0.0
    %530 = vmatmul.mubr.f32.gmra.mrb[0].mxu0 %v244
    %v531 = vpop.f32.mrb[0].mxu0
    %v532 = vadd.f32 0.0, %v531
    %v533 = vpop.f32.mrb[0].mxu0
    %v534 = vadd.f32 0.0, %v533
    %535 = vmatprep.mubr.f32.mxu0 0.0
    %536 = vmatmul.mubr.f32.gmra.mrb[0].mxu0 %v247
    %v537 = vpop.f32.mrb[0].mxu0
    %v538 = vadd.f32 0.0, %v537
    %v539 = vpop.f32.mrb[0].mxu0
    %v540 = vadd.f32 0.0, %v539
    %541 = vmatprep.mubr.f32.mxu0 0.0
    %542 = vmatmul.mubr.f32.gmra.mrb[0].mxu0 %v250
    %v543 = vpop.f32.mrb[0].mxu0
    %v544 = vadd.f32 0.0, %v543
    %v545 = vpop.f32.mrb[0].mxu0
    %v546 = vadd.f32 0.0, %v545
    %547 = vmatprep.mubr.f32.mxu0 0.0
    %548 = vmatmul.mubr.f32.gmra.mrb[0].mxu0 %v253
    %v549 = vpop.f32.mrb[0].mxu0
    %v550 = vadd.f32 0.0, %v549
    %v551 = vpop.f32.mrb[0].mxu0
    %v552 = vadd.f32 0.0, %v551
    %553 = vmatprep.mubr.f32.mxu0 0.0
    %554 = vmatmul.mubr.f32.gmra.mrb[0].mxu0 %v256
    %v555 = vpop.f32.mrb[0].mxu0
    %v556 = vadd.f32 0.0, %v555
    %v557 = vpop.f32.mrb[0].mxu0
    %v558 = vadd.f32 0.0, %v557
    %559 = vmatprep.mubr.f32.mxu0 0.0
    %560 = vmatmul.mubr.f32.gmra.mrb[0].mxu0 %v259
    %v561 = vpop.f32.mrb[0].mxu0
    %v562 = vadd.f32 0.0, %v561
    %v563 = vpop.f32.mrb[0].mxu0
    %v564 = vadd.f32 0.0, %v563
    %565 = vmatprep.mubr.f32.mxu0 0.0
    %566 = vmatmul.mubr.f32.gmra.mrb[0].mxu0 %v262
    %v567 = vpop.f32.mrb[0].mxu0
    %v568 = vadd.f32 0.0, %v567
    %v569 = vpop.f32.mrb[0].mxu0
    %v570 = vadd.f32 0.0, %v569
    %571 = vmatprep.mubr.f32.mxu0 0.0
    %572 = vmatmul.mubr.f32.gmra.mrb[0].mxu0 %v265
    %v573 = vpop.f32.mrb[0].mxu0
    %v574 = vadd.f32 0.0, %v573
    %v575 = vpop.f32.mrb[0].mxu0
    %v576 = vadd.f32 0.0, %v575
    %577 = vmatprep.mubr.f32.mxu0 0.0
    %578 = vmatmul.mubr.f32.gmra.mrb[0].mxu0 %v268
    %v579 = vpop.f32.mrb[0].mxu0
    %v580 = vadd.f32 0.0, %v579
    %v581 = vpop.f32.mrb[0].mxu0
    %v582 = vadd.f32 0.0, %v581
    %583 = vmatprep.mubr.f32.mxu0 0.0
    %584 = vmatmul.mubr.f32.gmra.mrb[0].mxu0 %v271
    %v585 = vpop.f32.mrb[0].mxu0
    %v586 = vadd.f32 0.0, %v585
    %v587 = vpop.f32.mrb[0].mxu0
    %v588 = vadd.f32 0.0, %v587
    %589 = vmatprep.mubr.f32.mxu0 0.0
    %590 = vmatmul.mubr.f32.gmra.mrb[0].mxu0 %v274
    %v591 = vpop.f32.mrb[0].mxu0
    %v592 = vadd.f32 0.0, %v591
    %v593 = vpop.f32.mrb[0].mxu0
    %v594 = vadd.f32 0.0, %v593
    %595 = vmatprep.mubr.f32.mxu0 0.0
    %596 = vmatmul.mubr.f32.gmra.mrb[0].mxu0 %v277
    %v597 = vpop.f32.mrb[0].mxu0
    %v598 = vadd.f32 0.0, %v597
    %v599 = vpop.f32.mrb[0].mxu0
    %v600 = vadd.f32 0.0, %v599
    %601 = vmatprep.mubr.f32.mxu0 0.0
    %602 = vmatmul.mubr.f32.gmra.mrb[0].mxu0 %v280
    %v603 = vpop.f32.mrb[0].mxu0
    %v604 = vadd.f32 0.0, %v603
    %v605 = vpop.f32.mrb[0].mxu0
    %v606 = vadd.f32 0.0, %v605
    %607 = vmatprep.mubr.f32.mxu0 0.0
    %608 = vmatmul.mubr.f32.gmra.mrb[0].mxu0 %v283
    %v609 = vpop.f32.mrb[0].mxu0
    %v610 = vadd.f32 0.0, %v609
    %v611 = vpop.f32.mrb[0].mxu0
    %v612 = vadd.f32 0.0, %v611
    %613 = vmatprep.mubr.f32.mxu0 0.0
    %614 = vmatmul.mubr.f32.gmra.mrb[0].mxu0 %v286
    %v615 = vpop.f32.mrb[0].mxu0
    %v616 = vadd.f32 0.0, %v615
    %v617 = vpop.f32.mrb[0].mxu0
    %v618 = vadd.f32 0.0, %v617
    %619 = vmatprep.mubr.f32.mxu0 0.0
    %620 = vmatmul.mubr.f32.gmra.mrb[0].mxu0 %v289
    %v621 = vpop.f32.mrb[0].mxu0
    %v622 = vadd.f32 0.0, %v621
    %v623 = vpop.f32.mrb[0].mxu0
    %v624 = vadd.f32 0.0, %v623
    %625 = vmatprep.mubr.f32.mxu0 0.0
    %626 = vmatmul.mubr.f32.gmra.mrb[0].mxu0 %v292
    %v627 = vpop.f32.mrb[0].mxu0
    %v628 = vadd.f32 0.0, %v627
    %v629 = vpop.f32.mrb[0].mxu0
    %v630 = vadd.f32 0.0, %v629
    %631 = vmatprep.mubr.f32.mxu0 0.0
    %632 = vmatmul.mubr.f32.gmra.mrb[0].mxu0 %v295
    %v633 = vpop.f32.mrb[0].mxu0
    %v634 = vadd.f32 0.0, %v633
    %v635 = vpop.f32.mrb[0].mxu0
    %v636 = vadd.f32 0.0, %v635
    %637 = vmatprep.mubr.f32.mxu0 0.0
    %638 = vmatmul.mubr.f32.gmra.mrb[0].mxu0 %v298
    %v639 = vpop.f32.mrb[0].mxu0
    %v640 = vadd.f32 0.0, %v639
    %v641 = vpop.f32.mrb[0].mxu0
    %v642 = vadd.f32 0.0, %v641
    %643 = vmatprep.mubr.f32.mxu0 0.0
    %644 = vmatmul.mubr.f32.gmra.mrb[0].mxu0 %v301
    %v645 = vpop.f32.mrb[0].mxu0
    %v646 = vadd.f32 0.0, %v645
    %v647 = vpop.f32.mrb[0].mxu0
    %v648 = vadd.f32 0.0, %v647
    %649 = vmatprep.mubr.f32.mxu0 0.0
    %650 = vmatmul.mubr.f32.gmra.mrb[0].mxu0 %v304
    %v651 = vpop.f32.mrb[0].mxu0
    %v652 = vadd.f32 0.0, %v651
    %v653 = vpop.f32.mrb[0].mxu0
    %v654 = vadd.f32 0.0, %v653
    %655 = vmatprep.mubr.f32.mxu0 0.0
    %656 = vmatmul.mubr.f32.gmra.mrb[0].mxu0 %v307
    %v657 = vpop.f32.mrb[0].mxu0
    %v658 = vadd.f32 0.0, %v657
    %v659 = vpop.f32.mrb[0].mxu0
    %v660 = vadd.f32 0.0, %v659
    %661 = vdwg.mxu0
    %662 = vmatprep.subr.mxu0 %v64
    %663 = vmatpush1.msra.mxu0 %v63
    %664 = vmatprep.subr.mxu0 0.0
    %665 = vmatpush1.msra.mxu0 0.0
    %666 = vmatprep.subr.mxu0 0.0
    %667 = vmatpush1.msra.mxu0 0.0
    %668 = vmatprep.subr.mxu0 0.0
    %669 = vmatpush1.msra.mxu0 0.0
    %670 = vmatprep.subr.mxu0 0.0
    %671 = vmatpush1.msra.mxu0 0.0
    %672 = vmatprep.subr.mxu0 0.0
    %673 = vmatpush1.msra.mxu0 0.0
    %674 = vmatprep.subr.mxu0 0.0
    %675 = vmatpush1.msra.mxu0 0.0
    %676 = vmatprep.subr.mxu0 0.0
    %677 = vmatpush1.msra.mxu0 0.0
    %678 = vmatprep.subr.mxu0 0.0
    %679 = vmatpush1.msra.mxu0 0.0
    %680 = vmatprep.subr.mxu0 0.0
    %681 = vmatpush1.msra.mxu0 0.0
    %682 = vmatprep.subr.mxu0 0.0
    %683 = vmatpush1.msra.mxu0 0.0
    %684 = vmatprep.subr.mxu0 0.0
    %685 = vmatpush1.msra.mxu0 0.0
    %686 = vmatprep.subr.mxu0 0.0
    %687 = vmatpush1.msra.mxu0 0.0
    %688 = vmatprep.subr.mxu0 0.0
    %689 = vmatpush1.msra.mxu0 0.0
    %690 = vmatprep.subr.mxu0 0.0
    %691 = vmatpush1.msra.mxu0 0.0
    %692 = vmatprep.subr.mxu0 0.0
    %693 = vmatpush1.msra.mxu0 0.0
    %694 = vmatprep.subr.mxu0 0.0
    %695 = vmatpush1.msra.mxu0 0.0
    %696 = vmatprep.subr.mxu0 0.0
    %697 = vmatpush1.msra.mxu0 0.0
    %698 = vmatprep.subr.mxu0 0.0
    %699 = vmatpush1.msra.mxu0 0.0
    %700 = vmatprep.subr.mxu0 0.0
    %701 = vmatpush1.msra.mxu0 0.0
    %702 = vmatprep.subr.mxu0 0.0
    %703 = vmatpush1.msra.mxu0 0.0
    %704 = vmatprep.subr.mxu0 0.0
    %705 = vmatpush1.msra.mxu0 0.0
    %706 = vmatprep.subr.mxu0 0.0
    %707 = vmatpush1.msra.mxu0 0.0
    %708 = vmatprep.subr.mxu0 0.0
    %709 = vmatpush1.msra.mxu0 0.0
    %710 = vmatprep.subr.mxu0 0.0
    %711 = vmatpush1.msra.mxu0 0.0
    %712 = vmatprep.subr.mxu0 0.0
    %713 = vmatpush1.msra.mxu0 0.0
    %714 = vmatprep.subr.mxu0 0.0
    %715 = vmatpush1.msra.mxu0 0.0
    %716 = vmatprep.subr.mxu0 0.0
    %717 = vmatpush1.msra.mxu0 0.0
    %718 = vmatprep.subr.mxu0 0.0
    %719 = vmatpush1.msra.mxu0 0.0
    %720 = vmatprep.subr.mxu0 0.0
    %721 = vmatpush1.msra.mxu0 0.0
    %722 = vmatprep.subr.mxu0 0.0
    %723 = vmatpush1.msra.mxu0 0.0
    %724 = vmatprep.subr.mxu0 0.0
    %725 = vmatpush1.msra.mxu0 0.0
    %726 = vmatprep.mubr.f32.mxu0 0.0
    %727 = vmatmul.mubr.f32.gmra.mrb[0].mxu0 %v166
    %v728 = vpop.f32.mrb[0].mxu0
    %v729 = vadd.f32 0.0, %v728
    %v730 = vpop.f32.mrb[0].mxu0
    %v731 = vadd.f32 0.0, %v730
    %732 = vmatprep.mubr.f32.mxu0 0.0
    %733 = vmatmul.mubr.f32.gmra.mrb[0].mxu0 %v169
    %v734 = vpop.f32.mrb[0].mxu0
    %v735 = vadd.f32 0.0, %v734
    %v736 = vpop.f32.mrb[0].mxu0
    %v737 = vadd.f32 0.0, %v736
    %738 = vmatprep.mubr.f32.mxu0 0.0
    %739 = vmatmul.mubr.f32.gmra.mrb[0].mxu0 %v172
    %v740 = vpop.f32.mrb[0].mxu0
    %v741 = vadd.f32 0.0, %v740
    %v742 = vpop.f32.mrb[0].mxu0
    %v743 = vadd.f32 0.0, %v742
    %744 = vmatprep.mubr.f32.mxu0 0.0
    %745 = vmatmul.mubr.f32.gmra.mrb[0].mxu0 %v175
    %v746 = vpop.f32.mrb[0].mxu0
    %v747 = vadd.f32 0.0, %v746
    %v748 = vpop.f32.mrb[0].mxu0
    %v749 = vadd.f32 0.0, %v748
    %750 = vmatprep.mubr.f32.mxu0 0.0
    %751 = vmatmul.mubr.f32.gmra.mrb[0].mxu0 %v178
    %v752 = vpop.f32.mrb[0].mxu0
    %v753 = vadd.f32 0.0, %v752
    %v754 = vpop.f32.mrb[0].mxu0
    %v755 = vadd.f32 0.0, %v754
    %756 = vmatprep.mubr.f32.mxu0 0.0
    %757 = vmatmul.mubr.f32.gmra.mrb[0].mxu0 %v181
    %v758 = vpop.f32.mrb[0].mxu0
    %v759 = vadd.f32 0.0, %v758
    %v760 = vpop.f32.mrb[0].mxu0
    %v761 = vadd.f32 0.0, %v760
    %762 = vmatprep.mubr.f32.mxu0 0.0
    %763 = vmatmul.mubr.f32.gmra.mrb[0].mxu0 %v184
    %v764 = vpop.f32.mrb[0].mxu0
    %v765 = vadd.f32 0.0, %v764
    %v766 = vpop.f32.mrb[0].mxu0
    %v767 = vadd.f32 0.0, %v766
    %768 = vmatprep.mubr.f32.mxu0 0.0
    %769 = vmatmul.mubr.f32.gmra.mrb[0].mxu0 %v187
    %v770 = vpop.f32.mrb[0].mxu0
    %v771 = vadd.f32 0.0, %v770
    %v772 = vpop.f32.mrb[0].mxu0
    %v773 = vadd.f32 0.0, %v772
    %774 = vmatprep.mubr.f32.mxu0 0.0
    %775 = vmatmul.mubr.f32.gmra.mrb[0].mxu0 %v190
    %v776 = vpop.f32.mrb[0].mxu0
    %v777 = vadd.f32 0.0, %v776
    %v778 = vpop.f32.mrb[0].mxu0
    %v779 = vadd.f32 0.0, %v778
    %780 = vmatprep.mubr.f32.mxu0 0.0
    %781 = vmatmul.mubr.f32.gmra.mrb[0].mxu0 %v193
    %v782 = vpop.f32.mrb[0].mxu0
    %v783 = vadd.f32 0.0, %v782
    %v784 = vpop.f32.mrb[0].mxu0
    %v785 = vadd.f32 0.0, %v784
    %786 = vmatprep.mubr.f32.mxu0 0.0
    %787 = vmatmul.mubr.f32.gmra.mrb[0].mxu0 %v196
    %v788 = vpop.f32.mrb[0].mxu0
    %v789 = vadd.f32 0.0, %v788
    %v790 = vpop.f32.mrb[0].mxu0
    %v791 = vadd.f32 0.0, %v790
    %792 = vmatprep.mubr.f32.mxu0 0.0
    %793 = vmatmul.mubr.f32.gmra.mrb[0].mxu0 %v199
    %v794 = vpop.f32.mrb[0].mxu0
    %v795 = vadd.f32 0.0, %v794
    %v796 = vpop.f32.mrb[0].mxu0
    %v797 = vadd.f32 0.0, %v796
    %798 = vmatprep.mubr.f32.mxu0 0.0
    %799 = vmatmul.mubr.f32.gmra.mrb[0].mxu0 %v202
    %v800 = vpop.f32.mrb[0].mxu0
    %v801 = vadd.f32 0.0, %v800
    %v802 = vpop.f32.mrb[0].mxu0
    %v803 = vadd.f32 0.0, %v802
    %804 = vmatprep.mubr.f32.mxu0 0.0
    %805 = vmatmul.mubr.f32.gmra.mrb[0].mxu0 %v205
    %v806 = vpop.f32.mrb[0].mxu0
    %v807 = vadd.f32 0.0, %v806
    %v808 = vpop.f32.mrb[0].mxu0
    %v809 = vadd.f32 0.0, %v808
    %810 = vmatprep.mubr.f32.mxu0 0.0
    %811 = vmatmul.mubr.f32.gmra.mrb[0].mxu0 %v208
    %v812 = vpop.f32.mrb[0].mxu0
    %v813 = vadd.f32 0.0, %v812
    %v814 = vpop.f32.mrb[0].mxu0
    %v815 = vadd.f32 0.0, %v814
    %816 = vmatprep.mubr.f32.mxu0 0.0
    %817 = vmatmul.mubr.f32.gmra.mrb[0].mxu0 %v211
    %v818 = vpop.f32.mrb[0].mxu0
    %v819 = vadd.f32 0.0, %v818
    %v820 = vpop.f32.mrb[0].mxu0
    %v821 = vadd.f32 0.0, %v820
    %822 = vmatprep.mubr.f32.mxu0 0.0
    %823 = vmatmul.mubr.f32.gmra.mrb[0].mxu0 %v214
    %v824 = vpop.f32.mrb[0].mxu0
    %v825 = vadd.f32 0.0, %v824
    %v826 = vpop.f32.mrb[0].mxu0
    %v827 = vadd.f32 0.0, %v826
    %828 = vmatprep.mubr.f32.mxu0 0.0
    %829 = vmatmul.mubr.f32.gmra.mrb[0].mxu0 %v217
    %v830 = vpop.f32.mrb[0].mxu0
    %v831 = vadd.f32 0.0, %v830
    %v832 = vpop.f32.mrb[0].mxu0
    %v833 = vadd.f32 0.0, %v832
    %834 = vmatprep.mubr.f32.mxu0 0.0
    %835 = vmatmul.mubr.f32.gmra.mrb[0].mxu0 %v220
    %v836 = vpop.f32.mrb[0].mxu0
    %v837 = vadd.f32 0.0, %v836
    %v838 = vpop.f32.mrb[0].mxu0
    %v839 = vadd.f32 0.0, %v838
    %840 = vmatprep.mubr.f32.mxu0 0.0
    %841 = vmatmul.mubr.f32.gmra.mrb[0].mxu0 %v223
    %v842 = vpop.f32.mrb[0].mxu0
    %v843 = vadd.f32 0.0, %v842
    %v844 = vpop.f32.mrb[0].mxu0
    %v845 = vadd.f32 0.0, %v844
    %846 = vmatprep.mubr.f32.mxu0 0.0
    %847 = vmatmul.mubr.f32.gmra.mrb[0].mxu0 %v226
    %v848 = vpop.f32.mrb[0].mxu0
    %v849 = vadd.f32 0.0, %v848
    %v850 = vpop.f32.mrb[0].mxu0
    %v851 = vadd.f32 0.0, %v850
    %852 = vmatprep.mubr.f32.mxu0 0.0
    %853 = vmatmul.mubr.f32.gmra.mrb[0].mxu0 %v229
    %v854 = vpop.f32.mrb[0].mxu0
    %v855 = vadd.f32 0.0, %v854
    %v856 = vpop.f32.mrb[0].mxu0
    %v857 = vadd.f32 0.0, %v856
    %858 = vmatprep.mubr.f32.mxu0 0.0
    %859 = vmatmul.mubr.f32.gmra.mrb[0].mxu0 %v232
    %v860 = vpop.f32.mrb[0].mxu0
    %v861 = vadd.f32 0.0, %v860
    %v862 = vpop.f32.mrb[0].mxu0
    %v863 = vadd.f32 0.0, %v862
    %864 = vmatprep.mubr.f32.mxu0 0.0
    %865 = vmatmul.mubr.f32.gmra.mrb[0].mxu0 %v235
    %v866 = vpop.f32.mrb[0].mxu0
    %v867 = vadd.f32 0.0, %v866
    %v868 = vpop.f32.mrb[0].mxu0
    %v869 = vadd.f32 0.0, %v868
    %870 = vmatprep.mubr.f32.mxu0 0.0
    %871 = vmatmul.mubr.f32.gmra.mrb[0].mxu0 %v238
    %v872 = vpop.f32.mrb[0].mxu0
    %v873 = vadd.f32 0.0, %v872
    %v874 = vpop.f32.mrb[0].mxu0
    %v875 = vadd.f32 0.0, %v874
    %876 = vmatprep.mubr.f32.mxu0 0.0
    %877 = vmatmul.mubr.f32.gmra.mrb[0].mxu0 %v241
    %v878 = vpop.f32.mrb[0].mxu0
    %v879 = vadd.f32 0.0, %v878
    %v880 = vpop.f32.mrb[0].mxu0
    %v881 = vadd.f32 0.0, %v880
    %882 = vmatprep.mubr.f32.mxu0 0.0
    %883 = vmatmul.mubr.f32.gmra.mrb[0].mxu0 %v244
    %v884 = vpop.f32.mrb[0].mxu0
    %v885 = vadd.f32 0.0, %v884
    %v886 = vpop.f32.mrb[0].mxu0
    %v887 = vadd.f32 0.0, %v886
    %888 = vmatprep.mubr.f32.mxu0 0.0
    %889 = vmatmul.mubr.f32.gmra.mrb[0].mxu0 %v247
    %v890 = vpop.f32.mrb[0].mxu0
    %v891 = vadd.f32 0.0, %v890
    %v892 = vpop.f32.mrb[0].mxu0
    %v893 = vadd.f32 0.0, %v892
    %894 = vmatprep.mubr.f32.mxu0 0.0
    %895 = vmatmul.mubr.f32.gmra.mrb[0].mxu0 %v250
    %v896 = vpop.f32.mrb[0].mxu0
    %v897 = vadd.f32 0.0, %v896
    %v898 = vpop.f32.mrb[0].mxu0
    %v899 = vadd.f32 0.0, %v898
    %900 = vmatprep.mubr.f32.mxu0 0.0
    %901 = vmatmul.mubr.f32.gmra.mrb[0].mxu0 %v253
    %v902 = vpop.f32.mrb[0].mxu0
    %v903 = vadd.f32 0.0, %v902
    %v904 = vpop.f32.mrb[0].mxu0
    %v905 = vadd.f32 0.0, %v904
    %906 = vmatprep.mubr.f32.mxu0 0.0
    %907 = vmatmul.mubr.f32.gmra.mrb[0].mxu0 %v256
    %v908 = vpop.f32.mrb[0].mxu0
    %v909 = vadd.f32 0.0, %v908
    %v910 = vpop.f32.mrb[0].mxu0
    %v911 = vadd.f32 0.0, %v910
    %912 = vmatprep.mubr.f32.mxu0 0.0
    %913 = vmatmul.mubr.f32.gmra.mrb[0].mxu0 %v259
    %v914 = vpop.f32.mrb[0].mxu0
    %v915 = vadd.f32 0.0, %v914
    %v916 = vpop.f32.mrb[0].mxu0
    %v917 = vadd.f32 0.0, %v916
    %918 = vmatprep.mubr.f32.mxu0 0.0
    %919 = vmatmul.mubr.f32.gmra.mrb[0].mxu0 %v262
    %v920 = vpop.f32.mrb[0].mxu0
    %v921 = vadd.f32 0.0, %v920
    %v922 = vpop.f32.mrb[0].mxu0
    %v923 = vadd.f32 0.0, %v922
    %924 = vmatprep.mubr.f32.mxu0 0.0
    %925 = vmatmul.mubr.f32.gmra.mrb[0].mxu0 %v265
    %v926 = vpop.f32.mrb[0].mxu0
    %v927 = vadd.f32 0.0, %v926
    %v928 = vpop.f32.mrb[0].mxu0
    %v929 = vadd.f32 0.0, %v928
    %930 = vmatprep.mubr.f32.mxu0 0.0
    %931 = vmatmul.mubr.f32.gmra.mrb[0].mxu0 %v268
    %v932 = vpop.f32.mrb[0].mxu0
    %v933 = vadd.f32 0.0, %v932
    %v934 = vpop.f32.mrb[0].mxu0
    %v935 = vadd.f32 0.0, %v934
    %936 = vmatprep.mubr.f32.mxu0 0.0
    %937 = vmatmul.mubr.f32.gmra.mrb[0].mxu0 %v271
    %v938 = vpop.f32.mrb[0].mxu0
    %v939 = vadd.f32 0.0, %v938
    %v940 = vpop.f32.mrb[0].mxu0
    %v941 = vadd.f32 0.0, %v940
    %942 = vmatprep.mubr.f32.mxu0 0.0
    %943 = vmatmul.mubr.f32.gmra.mrb[0].mxu0 %v274
    %v944 = vpop.f32.mrb[0].mxu0
    %v945 = vadd.f32 0.0, %v944
    %v946 = vpop.f32.mrb[0].mxu0
    %v947 = vadd.f32 0.0, %v946
    %948 = vmatprep.mubr.f32.mxu0 0.0
    %949 = vmatmul.mubr.f32.gmra.mrb[0].mxu0 %v277
    %v950 = vpop.f32.mrb[0].mxu0
    %v951 = vadd.f32 0.0, %v950
    %v952 = vpop.f32.mrb[0].mxu0
    %v953 = vadd.f32 0.0, %v952
    %954 = vmatprep.mubr.f32.mxu0 0.0
    %955 = vmatmul.mubr.f32.gmra.mrb[0].mxu0 %v280
    %v956 = vpop.f32.mrb[0].mxu0
    %v957 = vadd.f32 0.0, %v956
    %v958 = vpop.f32.mrb[0].mxu0
    %v959 = vadd.f32 0.0, %v958
    %960 = vmatprep.mubr.f32.mxu0 0.0
    %961 = vmatmul.mubr.f32.gmra.mrb[0].mxu0 %v283
    %v962 = vpop.f32.mrb[0].mxu0
    %v963 = vadd.f32 0.0, %v962
    %v964 = vpop.f32.mrb[0].mxu0
    %v965 = vadd.f32 0.0, %v964
    %966 = vmatprep.mubr.f32.mxu0 0.0
    %967 = vmatmul.mubr.f32.gmra.mrb[0].mxu0 %v286
    %v968 = vpop.f32.mrb[0].mxu0
    %v969 = vadd.f32 0.0, %v968
    %v970 = vpop.f32.mrb[0].mxu0
    %v971 = vadd.f32 0.0, %v970
    %972 = vmatprep.mubr.f32.mxu0 0.0
    %973 = vmatmul.mubr.f32.gmra.mrb[0].mxu0 %v289
    %v974 = vpop.f32.mrb[0].mxu0
    %v975 = vadd.f32 0.0, %v974
    %v976 = vpop.f32.mrb[0].mxu0
    %v977 = vadd.f32 0.0, %v976
    %978 = vmatprep.mubr.f32.mxu0 0.0
    %979 = vmatmul.mubr.f32.gmra.mrb[0].mxu0 %v292
    %v980 = vpop.f32.mrb[0].mxu0
    %v981 = vadd.f32 0.0, %v980
    %v982 = vpop.f32.mrb[0].mxu0
    %v983 = vadd.f32 0.0, %v982
    %984 = vmatprep.mubr.f32.mxu0 0.0
    %985 = vmatmul.mubr.f32.gmra.mrb[0].mxu0 %v295
    %v986 = vpop.f32.mrb[0].mxu0
    %v987 = vadd.f32 0.0, %v986
    %v988 = vpop.f32.mrb[0].mxu0
    %v989 = vadd.f32 0.0, %v988
    %990 = vmatprep.mubr.f32.mxu0 0.0
    %991 = vmatmul.mubr.f32.gmra.mrb[0].mxu0 %v298
    %v992 = vpop.f32.mrb[0].mxu0
    %v993 = vadd.f32 0.0, %v992
    %v994 = vpop.f32.mrb[0].mxu0
    %v995 = vadd.f32 0.0, %v994
    %996 = vmatprep.mubr.f32.mxu0 0.0
    %997 = vmatmul.mubr.f32.gmra.mrb[0].mxu0 %v301
    %v998 = vpop.f32.mrb[0].mxu0
    %v999 = vadd.f32 0.0, %v998
    %v1000 = vpop.f32.mrb[0].mxu0
    %v1001 = vadd.f32 0.0, %v1000
    %1002 = vmatprep.mubr.f32.mxu0 0.0
    %1003 = vmatmul.mubr.f32.gmra.mrb[0].mxu0 %v304
    %v1004 = vpop.f32.mrb[0].mxu0
    %v1005 = vadd.f32 0.0, %v1004
    %v1006 = vpop.f32.mrb[0].mxu0
    %v1007 = vadd.f32 0.0, %v1006
    %1008 = vmatprep.mubr.f32.mxu0 0.0
    %1009 = vmatmul.mubr.f32.gmra.mrb[0].mxu0 %v307
    %v1010 = vpop.f32.mrb[0].mxu0
    %v1011 = vadd.f32 0.0, %v1010
    %v1012 = vpop.f32.mrb[0].mxu0
    %v1013 = vadd.f32 0.0, %v1012
    %1014 = vdwg.mxu0
    %v1015 = vmax.f32 %v472, %v474
    %1016 = vmax.xlane.f32.xlu0 %v1015
    %v1017 = vpop.xlane.xlu0 %1016
    %v1018 = vmax.f32 %v478, %v480
    %1019 = vmax.xlane.f32.xlu0 %v1018
    %v1020 = vpop.xlane.xlu0 %1019
    %v1021 = vmax.f32 %v484, %v486
    %1022 = vmax.xlane.f32.xlu0 %v1021
    %v1023 = vpop.xlane.xlu0 %1022
    %v1024 = vmax.f32 %v490, %v492
    %1025 = vmax.xlane.f32.xlu0 %v1024
    %v1026 = vpop.xlane.xlu0 %1025
    %v1027 = vmax.f32 %v496, %v498
    %1028 = vmax.xlane.f32.xlu0 %v1027
    %v1029 = vpop.xlane.xlu0 %1028
    %v1030 = vmax.f32 %v502, %v504
    %1031 = vmax.xlane.f32.xlu0 %v1030
    %v1032 = vpop.xlane.xlu0 %1031
    %v1033 = vmax.f32 %v508, %v510
    %1034 = vmax.xlane.f32.xlu0 %v1033
    %v1035 = vpop.xlane.xlu0 %1034
    %v1036 = vmax.f32 %v514, %v516
    %1037 = vmax.xlane.f32.xlu0 %v1036
    %v1038 = vpop.xlane.xlu0 %1037
    %v1039 = vmax.f32 %v520, %v522
    %1040 = vmax.xlane.f32.xlu0 %v1039
    %v1041 = vpop.xlane.xlu0 %1040
    %v1042 = vmax.f32 %v526, %v528
    %1043 = vmax.xlane.f32.xlu0 %v1042
    %v1044 = vpop.xlane.xlu0 %1043
    %v1045 = vmax.f32 %v532, %v534
    %1046 = vmax.xlane.f32.xlu0 %v1045
    %v1047 = vpop.xlane.xlu0 %1046
    %v1048 = vmax.f32 %v538, %v540
    %1049 = vmax.xlane.f32.xlu0 %v1048
    %v1050 = vpop.xlane.xlu0 %1049
    %v1051 = vmax.f32 %v544, %v546
    %1052 = vmax.xlane.f32.xlu0 %v1051
    %v1053 = vpop.xlane.xlu0 %1052
    %v1054 = vmax.f32 %v550, %v552
    %1055 = vmax.xlane.f32.xlu0 %v1054
    %v1056 = vpop.xlane.xlu0 %1055
    %v1057 = vmax.f32 %v556, %v558
    %1058 = vmax.xlane.f32.xlu0 %v1057
    %v1059 = vpop.xlane.xlu0 %1058
    %v1060 = vmax.f32 %v562, %v564
    %1061 = vmax.xlane.f32.xlu0 %v1060
    %v1062 = vpop.xlane.xlu0 %1061
    %v1063 = vmax.f32 %v825, %v827
    %1064 = vmax.xlane.f32.xlu0 %v1063
    %v1065 = vpop.xlane.xlu0 %1064
    %v1066 = vmax.f32 %v831, %v833
    %1067 = vmax.xlane.f32.xlu0 %v1066
    %v1068 = vpop.xlane.xlu0 %1067
    %v1069 = vmax.f32 %v837, %v839
    %1070 = vmax.xlane.f32.xlu0 %v1069
    %v1071 = vpop.xlane.xlu0 %1070
    %v1072 = vmax.f32 %v843, %v845
    %1073 = vmax.xlane.f32.xlu0 %v1072
    %v1074 = vpop.xlane.xlu0 %1073
    %v1075 = vmax.f32 %v849, %v851
    %1076 = vmax.xlane.f32.xlu0 %v1075
    %v1077 = vpop.xlane.xlu0 %1076
    %v1078 = vmax.f32 %v855, %v857
    %1079 = vmax.xlane.f32.xlu0 %v1078
    %v1080 = vpop.xlane.xlu0 %1079
    %v1081 = vmax.f32 %v861, %v863
    %1082 = vmax.xlane.f32.xlu0 %v1081
    %v1083 = vpop.xlane.xlu0 %1082
    %v1084 = vmax.f32 %v867, %v869
    %1085 = vmax.xlane.f32.xlu0 %v1084
    %v1086 = vpop.xlane.xlu0 %1085
    %v1087 = vmax.f32 %v873, %v875
    %1088 = vmax.xlane.f32.xlu0 %v1087
    %v1089 = vpop.xlane.xlu0 %1088
    %v1090 = vmax.f32 %v879, %v881
    %1091 = vmax.xlane.f32.xlu0 %v1090
    %v1092 = vpop.xlane.xlu0 %1091
    %v1093 = vmax.f32 %v885, %v887
    %1094 = vmax.xlane.f32.xlu0 %v1093
    %v1095 = vpop.xlane.xlu0 %1094
    %v1096 = vmax.f32 %v891, %v893
    %1097 = vmax.xlane.f32.xlu0 %v1096
    %v1098 = vpop.xlane.xlu0 %1097
    %v1099 = vmax.f32 %v897, %v899
    %1100 = vmax.xlane.f32.xlu0 %v1099
    %v1101 = vpop.xlane.xlu0 %1100
    %v1102 = vmax.f32 %v903, %v905
    %1103 = vmax.xlane.f32.xlu0 %v1102
    %v1104 = vpop.xlane.xlu0 %1103
    %v1105 = vmax.f32 %v909, %v911
    %1106 = vmax.xlane.f32.xlu0 %v1105
    %v1107 = vpop.xlane.xlu0 %1106
    %v1108 = vmax.f32 %v915, %v917
    %1109 = vmax.xlane.f32.xlu0 %v1108
    %v1110 = vpop.xlane.xlu0 %1109
    %v1111 = vsub.f32 %v472, %v1017
    %v1112 = vsub.f32 %v474, %v1017
    %v1113 = vsub.f32 %v478, %v1020
    %v1114 = vsub.f32 %v480, %v1020
    %v1115 = vsub.f32 %v484, %v1023
    %v1116 = vsub.f32 %v486, %v1023
    %v1117 = vsub.f32 %v490, %v1026
    %v1118 = vsub.f32 %v492, %v1026
    %v1119 = vsub.f32 %v496, %v1029
    %v1120 = vsub.f32 %v498, %v1029
    %v1121 = vsub.f32 %v502, %v1032
    %v1122 = vsub.f32 %v504, %v1032
    %v1123 = vsub.f32 %v508, %v1035
    %v1124 = vsub.f32 %v510, %v1035
    %v1125 = vsub.f32 %v514, %v1038
    %v1126 = vsub.f32 %v516, %v1038
    %v1127 = vsub.f32 %v520, %v1041
    %v1128 = vsub.f32 %v522, %v1041
    %v1129 = vsub.f32 %v526, %v1044
    %v1130 = vsub.f32 %v528, %v1044
    %v1131 = vsub.f32 %v532, %v1047
    %v1132 = vsub.f32 %v534, %v1047
    %v1133 = vsub.f32 %v538, %v1050
    %v1134 = vsub.f32 %v540, %v1050
    %v1135 = vsub.f32 %v544, %v1053
    %v1136 = vsub.f32 %v546, %v1053
    %v1137 = vsub.f32 %v550, %v1056
    %v1138 = vsub.f32 %v552, %v1056
    %v1139 = vsub.f32 %v556, %v1059
    %v1140 = vsub.f32 %v558, %v1059
    %v1141 = vsub.f32 %v562, %v1062
    %v1142 = vsub.f32 %v564, %v1062
    %v1143 = vsub.f32 %v825, %v1065
    %v1144 = vsub.f32 %v827, %v1065
    %v1145 = vsub.f32 %v831, %v1068
    %v1146 = vsub.f32 %v833, %v1068
    %v1147 = vsub.f32 %v837, %v1071
    %v1148 = vsub.f32 %v839, %v1071
    %v1149 = vsub.f32 %v843, %v1074
    %v1150 = vsub.f32 %v845, %v1074
    %v1151 = vsub.f32 %v849, %v1077
    %v1152 = vsub.f32 %v851, %v1077
    %v1153 = vsub.f32 %v855, %v1080
    %v1154 = vsub.f32 %v857, %v1080
    %v1155 = vsub.f32 %v861, %v1083
    %v1156 = vsub.f32 %v863, %v1083
    %v1157 = vsub.f32 %v867, %v1086
    %v1158 = vsub.f32 %v869, %v1086
    %v1159 = vsub.f32 %v873, %v1089
    %v1160 = vsub.f32 %v875, %v1089
    %v1161 = vsub.f32 %v879, %v1092
    %v1162 = vsub.f32 %v881, %v1092
    %v1163 = vsub.f32 %v885, %v1095
    %v1164 = vsub.f32 %v887, %v1095
    %v1165 = vsub.f32 %v891, %v1098
    %v1166 = vsub.f32 %v893, %v1098
    %v1167 = vsub.f32 %v897, %v1101
    %v1168 = vsub.f32 %v899, %v1101
    %v1169 = vsub.f32 %v903, %v1104
    %v1170 = vsub.f32 %v905, %v1104
    %v1171 = vsub.f32 %v909, %v1107
    %v1172 = vsub.f32 %v911, %v1107
    %v1173 = vsub.f32 %v915, %v1110
    %v1174 = vsub.f32 %v917, %v1110
    %v1175 = vmul.f32 %v1111, 1.442695
    %v1176 = vpow.pop %v1175
    %v1177 = vmul.f32 %v1112, 1.442695
    %v1178 = vpow.pop %v1177
    %v1179 = vmul.f32 %v1113, 1.442695
    %v1180 = vpow.pop %v1179
    %v1181 = vmul.f32 %v1114, 1.442695
    %v1182 = vpow.pop %v1181
    %v1183 = vmul.f32 %v1115, 1.442695
    %v1184 = vpow.pop %v1183
    %v1185 = vmul.f32 %v1116, 1.442695
    %v1186 = vpow.pop %v1185
    %v1187 = vmul.f32 %v1117, 1.442695
    %v1188 = vpow.pop %v1187
    %v1189 = vmul.f32 %v1118, 1.442695
    %v1190 = vpow.pop %v1189
    %v1191 = vmul.f32 %v1119, 1.442695
    %v1192 = vpow.pop %v1191
    %v1193 = vmul.f32 %v1120, 1.442695
    %v1194 = vpow.pop %v1193
    %v1195 = vmul.f32 %v1121, 1.442695
    %v1196 = vpow.pop %v1195
    %v1197 = vmul.f32 %v1122, 1.442695
    %v1198 = vpow.pop %v1197
    %v1199 = vmul.f32 %v1123, 1.442695
    %v1200 = vpow.pop %v1199
    %v1201 = vmul.f32 %v1124, 1.442695
    %v1202 = vpow.pop %v1201
    %v1203 = vmul.f32 %v1125, 1.442695
    %v1204 = vpow.pop %v1203
    %v1205 = vmul.f32 %v1126, 1.442695
    %v1206 = vpow.pop %v1205
    %v1207 = vmul.f32 %v1127, 1.442695
    %v1208 = vpow.pop %v1207
    %v1209 = vmul.f32 %v1128, 1.442695
    %v1210 = vpow.pop %v1209
    %v1211 = vmul.f32 %v1129, 1.442695
    %v1212 = vpow.pop %v1211
    %v1213 = vmul.f32 %v1130, 1.442695
    %v1214 = vpow.pop %v1213
    %v1215 = vmul.f32 %v1131, 1.442695
    %v1216 = vpow.pop %v1215
    %v1217 = vmul.f32 %v1132, 1.442695
    %v1218 = vpow.pop %v1217
    %v1219 = vmul.f32 %v1133, 1.442695
    %v1220 = vpow.pop %v1219
    %v1221 = vmul.f32 %v1134, 1.442695
    %v1222 = vpow.pop %v1221
    %v1223 = vmul.f32 %v1135, 1.442695
    %v1224 = vpow.pop %v1223
    %v1225 = vmul.f32 %v1136, 1.442695
    %v1226 = vpow.pop %v1225
    %v1227 = vmul.f32 %v1137, 1.442695
    %v1228 = vpow.pop %v1227
    %v1229 = vmul.f32 %v1138, 1.442695
    %v1230 = vpow.pop %v1229
    %v1231 = vmul.f32 %v1139, 1.442695
    %v1232 = vpow.pop %v1231
    %v1233 = vmul.f32 %v1140, 1.442695
    %v1234 = vpow.pop %v1233
    %v1235 = vmul.f32 %v1141, 1.442695
    %v1236 = vpow.pop %v1235
    %v1237 = vmul.f32 %v1142, 1.442695
    %v1238 = vpow.pop %v1237
    %v1239 = vmul.f32 %v1143, 1.442695
    %v1240 = vpow.pop %v1239
    %v1241 = vmul.f32 %v1144, 1.442695
    %v1242 = vpow.pop %v1241
    %v1243 = vmul.f32 %v1145, 1.442695
    %v1244 = vpow.pop %v1243
    %v1245 = vmul.f32 %v1146, 1.442695
    %v1246 = vpow.pop %v1245
    %v1247 = vmul.f32 %v1147, 1.442695
    %v1248 = vpow.pop %v1247
    %v1249 = vmul.f32 %v1148, 1.442695
    %v1250 = vpow.pop %v1249
    %v1251 = vmul.f32 %v1149, 1.442695
    %v1252 = vpow.pop %v1251
    %v1253 = vmul.f32 %v1150, 1.442695
    %v1254 = vpow.pop %v1253
    %v1255 = vmul.f32 %v1151, 1.442695
    %v1256 = vpow.pop %v1255
    %v1257 = vmul.f32 %v1152, 1.442695
    %v1258 = vpow.pop %v1257
    %v1259 = vmul.f32 %v1153, 1.442695
    %v1260 = vpow.pop %v1259
    %v1261 = vmul.f32 %v1154, 1.442695
    %v1262 = vpow.pop %v1261
    %v1263 = vmul.f32 %v1155, 1.442695
    %v1264 = vpow.pop %v1263
    %v1265 = vmul.f32 %v1156, 1.442695
    %v1266 = vpow.pop %v1265
    %v1267 = vmul.f32 %v1157, 1.442695
    %v1268 = vpow.pop %v1267
    %v1269 = vmul.f32 %v1158, 1.442695
    %v1270 = vpow.pop %v1269
    %v1271 = vmul.f32 %v1159, 1.442695
    %v1272 = vpow.pop %v1271
    %v1273 = vmul.f32 %v1160, 1.442695
    %v1274 = vpow.pop %v1273
    %v1275 = vmul.f32 %v1161, 1.442695
    %v1276 = vpow.pop %v1275
    %v1277 = vmul.f32 %v1162, 1.442695
    %v1278 = vpow.pop %v1277
    %v1279 = vmul.f32 %v1163, 1.442695
    %v1280 = vpow.pop %v1279
    %v1281 = vmul.f32 %v1164, 1.442695
    %v1282 = vpow.pop %v1281
    %v1283 = vmul.f32 %v1165, 1.442695
    %v1284 = vpow.pop %v1283
    %v1285 = vmul.f32 %v1166, 1.442695
    %v1286 = vpow.pop %v1285
    %v1287 = vmul.f32 %v1167, 1.442695
    %v1288 = vpow.pop %v1287
    %v1289 = vmul.f32 %v1168, 1.442695
    %v1290 = vpow.pop %v1289
    %v1291 = vmul.f32 %v1169, 1.442695
    %v1292 = vpow.pop %v1291
    %v1293 = vmul.f32 %v1170, 1.442695
    %v1294 = vpow.pop %v1293
    %v1295 = vmul.f32 %v1171, 1.442695
    %v1296 = vpow.pop %v1295
    %v1297 = vmul.f32 %v1172, 1.442695
    %v1298 = vpow.pop %v1297
    %v1299 = vmul.f32 %v1173, 1.442695
    %v1300 = vpow.pop %v1299
    %v1301 = vmul.f32 %v1174, 1.442695
    %v1302 = vpow.pop %v1301
    %v1303 = vadd.f32 %v1176, %v1178
    %1304 = vadd.xlane.f32.xlu0 %v1303
    %v1305 = vpop.xlane.xlu0 %1304
    %v1306 = vadd.f32 %v1180, %v1182
    %1307 = vadd.xlane.f32.xlu0 %v1306
    %v1308 = vpop.xlane.xlu0 %1307
    %v1309 = vadd.f32 %v1184, %v1186
    %1310 = vadd.xlane.f32.xlu0 %v1309
    %v1311 = vpop.xlane.xlu0 %1310
    %v1312 = vadd.f32 %v1188, %v1190
    %1313 = vadd.xlane.f32.xlu0 %v1312
    %v1314 = vpop.xlane.xlu0 %1313
    %v1315 = vadd.f32 %v1192, %v1194
    %1316 = vadd.xlane.f32.xlu0 %v1315
    %v1317 = vpop.xlane.xlu0 %1316
    %v1318 = vadd.f32 %v1196, %v1198
    %1319 = vadd.xlane.f32.xlu0 %v1318
    %v1320 = vpop.xlane.xlu0 %1319
    %v1321 = vadd.f32 %v1200, %v1202
    %1322 = vadd.xlane.f32.xlu0 %v1321
    %v1323 = vpop.xlane.xlu0 %1322
    %v1324 = vadd.f32 %v1204, %v1206
    %1325 = vadd.xlane.f32.xlu0 %v1324
    %v1326 = vpop.xlane.xlu0 %1325
    %v1327 = vadd.f32 %v1208, %v1210
    %1328 = vadd.xlane.f32.xlu0 %v1327
    %v1329 = vpop.xlane.xlu0 %1328
    %v1330 = vadd.f32 %v1212, %v1214
    %1331 = vadd.xlane.f32.xlu0 %v1330
    %v1332 = vpop.xlane.xlu0 %1331
    %v1333 = vadd.f32 %v1216, %v1218
    %1334 = vadd.xlane.f32.xlu0 %v1333
    %v1335 = vpop.xlane.xlu0 %1334
    %v1336 = vadd.f32 %v1220, %v1222
    %1337 = vadd.xlane.f32.xlu0 %v1336
    %v1338 = vpop.xlane.xlu0 %1337
    %v1339 = vadd.f32 %v1224, %v1226
    %1340 = vadd.xlane.f32.xlu0 %v1339
    %v1341 = vpop.xlane.xlu0 %1340
    %v1342 = vadd.f32 %v1228, %v1230
    %1343 = vadd.xlane.f32.xlu0 %v1342
    %v1344 = vpop.xlane.xlu0 %1343
    %v1345 = vadd.f32 %v1232, %v1234
    %1346 = vadd.xlane.f32.xlu0 %v1345
    %v1347 = vpop.xlane.xlu0 %1346
    %v1348 = vadd.f32 %v1236, %v1238
    %1349 = vadd.xlane.f32.xlu0 %v1348
    %v1350 = vpop.xlane.xlu0 %1349
    %v1351 = vadd.f32 %v1240, %v1242
    %1352 = vadd.xlane.f32.xlu0 %v1351
    %v1353 = vpop.xlane.xlu0 %1352
    %v1354 = vadd.f32 %v1244, %v1246
    %1355 = vadd.xlane.f32.xlu0 %v1354
    %v1356 = vpop.xlane.xlu0 %1355
    %v1357 = vadd.f32 %v1248, %v1250
    %1358 = vadd.xlane.f32.xlu0 %v1357
    %v1359 = vpop.xlane.xlu0 %1358
    %v1360 = vadd.f32 %v1252, %v1254
    %1361 = vadd.xlane.f32.xlu0 %v1360
    %v1362 = vpop.xlane.xlu0 %1361
    %v1363 = vadd.f32 %v1256, %v1258
    %1364 = vadd.xlane.f32.xlu0 %v1363
    %v1365 = vpop.xlane.xlu0 %1364
    %v1366 = vadd.f32 %v1260, %v1262
    %1367 = vadd.xlane.f32.xlu0 %v1366
    %v1368 = vpop.xlane.xlu0 %1367
    %v1369 = vadd.f32 %v1264, %v1266
    %1370 = vadd.xlane.f32.xlu0 %v1369
    %v1371 = vpop.xlane.xlu0 %1370
    %v1372 = vadd.f32 %v1268, %v1270
    %1373 = vadd.xlane.f32.xlu0 %v1372
    %v1374 = vpop.xlane.xlu0 %1373
    %v1375 = vadd.f32 %v1272, %v1274
    %1376 = vadd.xlane.f32.xlu0 %v1375
    %v1377 = vpop.xlane.xlu0 %1376
    %v1378 = vadd.f32 %v1276, %v1278
    %1379 = vadd.xlane.f32.xlu0 %v1378
    %v1380 = vpop.xlane.xlu0 %1379
    %v1381 = vadd.f32 %v1280, %v1282
    %1382 = vadd.xlane.f32.xlu0 %v1381
    %v1383 = vpop.xlane.xlu0 %1382
    %v1384 = vadd.f32 %v1284, %v1286
    %1385 = vadd.xlane.f32.xlu0 %v1384
    %v1386 = vpop.xlane.xlu0 %1385
    %v1387 = vadd.f32 %v1288, %v1290
    %1388 = vadd.xlane.f32.xlu0 %v1387
    %v1389 = vpop.xlane.xlu0 %1388
    %v1390 = vadd.f32 %v1292, %v1294
    %1391 = vadd.xlane.f32.xlu0 %v1390
    %v1392 = vpop.xlane.xlu0 %1391
    %v1393 = vadd.f32 %v1296, %v1298
    %1394 = vadd.xlane.f32.xlu0 %v1393
    %v1395 = vpop.xlane.xlu0 %1394
    %v1396 = vadd.f32 %v1300, %v1302
    %1397 = vadd.xlane.f32.xlu0 %v1396
    %v1398 = vpop.xlane.xlu0 %1397
    %v1399 = vrcp.pop %v1305
    %v1400 = vmul.f32 1.0, %v1399
    %v1401 = vrcp.pop %v1308
    %v1402 = vmul.f32 1.0, %v1401
    %v1403 = vrcp.pop %v1311
    %v1404 = vmul.f32 1.0, %v1403
    %v1405 = vrcp.pop %v1314
    %v1406 = vmul.f32 1.0, %v1405
    %v1407 = vrcp.pop %v1317
    %v1408 = vmul.f32 1.0, %v1407
    %v1409 = vrcp.pop %v1320
    %v1410 = vmul.f32 1.0, %v1409
    %v1411 = vrcp.pop %v1323
    %v1412 = vmul.f32 1.0, %v1411
    %v1413 = vrcp.pop %v1326
    %v1414 = vmul.f32 1.0, %v1413
    %v1415 = vrcp.pop %v1329
    %v1416 = vmul.f32 1.0, %v1415
    %v1417 = vrcp.pop %v1332
    %v1418 = vmul.f32 1.0, %v1417
    %v1419 = vrcp.pop %v1335
    %v1420 = vmul.f32 1.0, %v1419
    %v1421 = vrcp.pop %v1338
    %v1422 = vmul.f32 1.0, %v1421
    %v1423 = vrcp.pop %v1341
    %v1424 = vmul.f32 1.0, %v1423
    %v1425 = vrcp.pop %v1344
    %v1426 = vmul.f32 1.0, %v1425
    %v1427 = vrcp.pop %v1347
    %v1428 = vmul.f32 1.0, %v1427
    %v1429 = vrcp.pop %v1350
    %v1430 = vmul.f32 1.0, %v1429
    %v1431 = vrcp.pop %v1353
    %v1432 = vmul.f32 1.0, %v1431
    %v1433 = vrcp.pop %v1356
    %v1434 = vmul.f32 1.0, %v1433
    %v1435 = vrcp.pop %v1359
    %v1436 = vmul.f32 1.0, %v1435
    %v1437 = vrcp.pop %v1362
    %v1438 = vmul.f32 1.0, %v1437
    %v1439 = vrcp.pop %v1365
    %v1440 = vmul.f32 1.0, %v1439
    %v1441 = vrcp.pop %v1368
    %v1442 = vmul.f32 1.0, %v1441
    %v1443 = vrcp.pop %v1371
    %v1444 = vmul.f32 1.0, %v1443
    %v1445 = vrcp.pop %v1374
    %v1446 = vmul.f32 1.0, %v1445
    %v1447 = vrcp.pop %v1377
    %v1448 = vmul.f32 1.0, %v1447
    %v1449 = vrcp.pop %v1380
    %v1450 = vmul.f32 1.0, %v1449
    %v1451 = vrcp.pop %v1383
    %v1452 = vmul.f32 1.0, %v1451
    %v1453 = vrcp.pop %v1386
    %v1454 = vmul.f32 1.0, %v1453
    %v1455 = vrcp.pop %v1389
    %v1456 = vmul.f32 1.0, %v1455
    %v1457 = vrcp.pop %v1392
    %v1458 = vmul.f32 1.0, %v1457
    %v1459 = vrcp.pop %v1395
    %v1460 = vmul.f32 1.0, %v1459
    %v1461 = vrcp.pop %v1398
    %v1462 = vmul.f32 1.0, %v1461
    %v1463 = vmul.f32 %v1176, %v1400
    %v1464 = vmul.f32 %v1178, %v1400
    %v1465 = vmul.f32 %v1180, %v1402
    %v1466 = vmul.f32 %v1182, %v1402
    %v1467 = vmul.f32 %v1184, %v1404
    %v1468 = vmul.f32 %v1186, %v1404
    %v1469 = vmul.f32 %v1188, %v1406
    %v1470 = vmul.f32 %v1190, %v1406
    %v1471 = vmul.f32 %v1192, %v1408
    %v1472 = vmul.f32 %v1194, %v1408
    %v1473 = vmul.f32 %v1196, %v1410
    %v1474 = vmul.f32 %v1198, %v1410
    %v1475 = vmul.f32 %v1200, %v1412
    %v1476 = vmul.f32 %v1202, %v1412
    %v1477 = vmul.f32 %v1204, %v1414
    %v1478 = vmul.f32 %v1206, %v1414
    %v1479 = vmul.f32 %v1208, %v1416
    %v1480 = vmul.f32 %v1210, %v1416
    %v1481 = vmul.f32 %v1212, %v1418
    %v1482 = vmul.f32 %v1214, %v1418
    %v1483 = vmul.f32 %v1216, %v1420
    %v1484 = vmul.f32 %v1218, %v1420
    %v1485 = vmul.f32 %v1220, %v1422
    %v1486 = vmul.f32 %v1222, %v1422
    %v1487 = vmul.f32 %v1224, %v1424
    %v1488 = vmul.f32 %v1226, %v1424
    %v1489 = vmul.f32 %v1228, %v1426
    %v1490 = vmul.f32 %v1230, %v1426
    %v1491 = vmul.f32 %v1232, %v1428
    %v1492 = vmul.f32 %v1234, %v1428
    %v1493 = vmul.f32 %v1236, %v1430
    %v1494 = vmul.f32 %v1238, %v1430
    %v1495 = vmul.f32 %v1240, %v1432
    %v1496 = vmul.f32 %v1242, %v1432
    %v1497 = vmul.f32 %v1244, %v1434
    %v1498 = vmul.f32 %v1246, %v1434
    %v1499 = vmul.f32 %v1248, %v1436
    %v1500 = vmul.f32 %v1250, %v1436
    %v1501 = vmul.f32 %v1252, %v1438
    %v1502 = vmul.f32 %v1254, %v1438
    %v1503 = vmul.f32 %v1256, %v1440
    %v1504 = vmul.f32 %v1258, %v1440
    %v1505 = vmul.f32 %v1260, %v1442
    %v1506 = vmul.f32 %v1262, %v1442
    %v1507 = vmul.f32 %v1264, %v1444
    %v1508 = vmul.f32 %v1266, %v1444
    %v1509 = vmul.f32 %v1268, %v1446
    %v1510 = vmul.f32 %v1270, %v1446
    %v1511 = vmul.f32 %v1272, %v1448
    %v1512 = vmul.f32 %v1274, %v1448
    %v1513 = vmul.f32 %v1276, %v1450
    %v1514 = vmul.f32 %v1278, %v1450
    %v1515 = vmul.f32 %v1280, %v1452
    %v1516 = vmul.f32 %v1282, %v1452
    %v1517 = vmul.f32 %v1284, %v1454
    %v1518 = vmul.f32 %v1286, %v1454
    %v1519 = vmul.f32 %v1288, %v1456
    %v1520 = vmul.f32 %v1290, %v1456
    %v1521 = vmul.f32 %v1292, %v1458
    %v1522 = vmul.f32 %v1294, %v1458
    %v1523 = vmul.f32 %v1296, %v1460
    %v1524 = vmul.f32 %v1298, %v1460
    %v1525 = vmul.f32 %v1300, %v1462
    %v1526 = vmul.f32 %v1302, %v1462
    %1527 = vmatprep.subr.mxu0 %v1464
    %1528 = vmatpush1.xpose.msra.mxu0 %v1463
    %1529 = vmatprep.subr.mxu0 %v1466
    %1530 = vmatpush1.xpose.msra.mxu0 %v1465
    %1531 = vmatprep.subr.mxu0 %v1468
    %1532 = vmatpush1.xpose.msra.mxu0 %v1467
    %1533 = vmatprep.subr.mxu0 %v1470
    %1534 = vmatpush1.xpose.msra.mxu0 %v1469
    %1535 = vmatprep.subr.mxu0 %v1472
    %1536 = vmatpush1.xpose.msra.mxu0 %v1471
    %1537 = vmatprep.subr.mxu0 %v1474
    %1538 = vmatpush1.xpose.msra.mxu0 %v1473
    %1539 = vmatprep.subr.mxu0 %v1476
    %1540 = vmatpush1.xpose.msra.mxu0 %v1475
    %1541 = vmatprep.subr.mxu0 %v1478
    %1542 = vmatpush1.xpose.msra.mxu0 %v1477
    %1543 = vmatprep.subr.mxu0 %v1480
    %1544 = vmatpush1.xpose.msra.mxu0 %v1479
    %1545 = vmatprep.subr.mxu0 %v1482
    %1546 = vmatpush1.xpose.msra.mxu0 %v1481
    %1547 = vmatprep.subr.mxu0 %v1484
    %1548 = vmatpush1.xpose.msra.mxu0 %v1483
    %1549 = vmatprep.subr.mxu0 %v1486
    %1550 = vmatpush1.xpose.msra.mxu0 %v1485
    %1551 = vmatprep.subr.mxu0 %v1488
    %1552 = vmatpush1.xpose.msra.mxu0 %v1487
    %1553 = vmatprep.subr.mxu0 %v1490
    %1554 = vmatpush1.xpose.msra.mxu0 %v1489
    %1555 = vmatprep.subr.mxu0 %v1492
    %1556 = vmatpush1.xpose.msra.mxu0 %v1491
    %1557 = vmatprep.subr.mxu0 %v1494
    %1558 = vmatpush1.xpose.msra.mxu0 %v1493
    %1559 = vmatprep.subr.mxu0 %v1496
    %1560 = vmatpush1.xpose.msra.mxu0 %v1495
    %1561 = vmatprep.subr.mxu0 %v1498
    %1562 = vmatpush1.xpose.msra.mxu0 %v1497
    %1563 = vmatprep.subr.mxu0 %v1500
    %1564 = vmatpush1.xpose.msra.mxu0 %v1499
    %1565 = vmatprep.subr.mxu0 %v1502
    %1566 = vmatpush1.xpose.msra.mxu0 %v1501
    %1567 = vmatprep.subr.mxu0 %v1504
    %1568 = vmatpush1.xpose.msra.mxu0 %v1503
    %1569 = vmatprep.subr.mxu0 %v1506
    %1570 = vmatpush1.xpose.msra.mxu0 %v1505
    %1571 = vmatprep.subr.mxu0 %v1508
    %1572 = vmatpush1.xpose.msra.mxu0 %v1507
    %1573 = vmatprep.subr.mxu0 %v1510
    %1574 = vmatpush1.xpose.msra.mxu0 %v1509
    %1575 = vmatprep.subr.mxu0 %v1512
    %1576 = vmatpush1.xpose.msra.mxu0 %v1511
    %1577 = vmatprep.subr.mxu0 %v1514
    %1578 = vmatpush1.xpose.msra.mxu0 %v1513
    %1579 = vmatprep.subr.mxu0 %v1516
    %1580 = vmatpush1.xpose.msra.mxu0 %v1515
    %1581 = vmatprep.subr.mxu0 %v1518
    %1582 = vmatpush1.xpose.msra.mxu0 %v1517
    %1583 = vmatprep.subr.mxu0 %v1520
    %1584 = vmatpush1.xpose.msra.mxu0 %v1519
    %1585 = vmatprep.subr.mxu0 %v1522
    %1586 = vmatpush1.xpose.msra.mxu0 %v1521
    %1587 = vmatprep.subr.mxu0 %v1524
    %1588 = vmatpush1.xpose.msra.mxu0 %v1523
    %1589 = vmatprep.subr.mxu0 %v1526
    %1590 = vmatpush1.xpose.msra.mxu0 %v1525
    %1591 = vmatprep.mubr.f32.mxu0 %v570
    %1592 = vmatmul.mubr.f32.gmra.mrb[0].mxu0 %v568
    %v1593 = vpop.f32.mrb[0].mxu0
    %v1594 = vadd.f32 0.0, %v1593
    %v1595 = vpop.f32.mrb[0].mxu0
    %v1596 = vadd.f32 0.0, %v1595
    %1597 = vmatprep.mubr.f32.mxu0 %v576
    %1598 = vmatmul.mubr.f32.gmra.mrb[0].mxu0 %v574
    %v1599 = vpop.f32.mrb[0].mxu0
    %v1600 = vadd.f32 0.0, %v1599
    %v1601 = vpop.f32.mrb[0].mxu0
    %v1602 = vadd.f32 0.0, %v1601
    %1603 = vmatprep.mubr.f32.mxu0 %v582
    %1604 = vmatmul.mubr.f32.gmra.mrb[0].mxu0 %v580
    %v1605 = vpop.f32.mrb[0].mxu0
    %v1606 = vadd.f32 0.0, %v1605
    %v1607 = vpop.f32.mrb[0].mxu0
    %v1608 = vadd.f32 0.0, %v1607
    %1609 = vmatprep.mubr.f32.mxu0 %v588
    %1610 = vmatmul.mubr.f32.gmra.mrb[0].mxu0 %v586
    %v1611 = vpop.f32.mrb[0].mxu0
    %v1612 = vadd.f32 0.0, %v1611
    %v1613 = vpop.f32.mrb[0].mxu0
    %v1614 = vadd.f32 0.0, %v1613
    %1615 = vmatprep.mubr.f32.mxu0 %v594
    %1616 = vmatmul.mubr.f32.gmra.mrb[0].mxu0 %v592
    %v1617 = vpop.f32.mrb[0].mxu0
    %v1618 = vadd.f32 0.0, %v1617
    %v1619 = vpop.f32.mrb[0].mxu0
    %v1620 = vadd.f32 0.0, %v1619
    %1621 = vmatprep.mubr.f32.mxu0 %v600
    %1622 = vmatmul.mubr.f32.gmra.mrb[0].mxu0 %v598
    %v1623 = vpop.f32.mrb[0].mxu0
    %v1624 = vadd.f32 0.0, %v1623
    %v1625 = vpop.f32.mrb[0].mxu0
    %v1626 = vadd.f32 0.0, %v1625
    %1627 = vmatprep.mubr.f32.mxu0 %v606
    %1628 = vmatmul.mubr.f32.gmra.mrb[0].mxu0 %v604
    %v1629 = vpop.f32.mrb[0].mxu0
    %v1630 = vadd.f32 0.0, %v1629
    %v1631 = vpop.f32.mrb[0].mxu0
    %v1632 = vadd.f32 0.0, %v1631
    %1633 = vmatprep.mubr.f32.mxu0 %v612
    %1634 = vmatmul.mubr.f32.gmra.mrb[0].mxu0 %v610
    %v1635 = vpop.f32.mrb[0].mxu0
    %v1636 = vadd.f32 0.0, %v1635
    %v1637 = vpop.f32.mrb[0].mxu0
    %v1638 = vadd.f32 0.0, %v1637
    %1639 = vmatprep.mubr.f32.mxu0 %v618
    %1640 = vmatmul.mubr.f32.gmra.mrb[0].mxu0 %v616
    %v1641 = vpop.f32.mrb[0].mxu0
    %v1642 = vadd.f32 0.0, %v1641
    %v1643 = vpop.f32.mrb[0].mxu0
    %v1644 = vadd.f32 0.0, %v1643
    %1645 = vmatprep.mubr.f32.mxu0 %v624
    %1646 = vmatmul.mubr.f32.gmra.mrb[0].mxu0 %v622
    %v1647 = vpop.f32.mrb[0].mxu0
    %v1648 = vadd.f32 0.0, %v1647
    %v1649 = vpop.f32.mrb[0].mxu0
    %v1650 = vadd.f32 0.0, %v1649
    %1651 = vmatprep.mubr.f32.mxu0 %v630
    %1652 = vmatmul.mubr.f32.gmra.mrb[0].mxu0 %v628
    %v1653 = vpop.f32.mrb[0].mxu0
    %v1654 = vadd.f32 0.0, %v1653
    %v1655 = vpop.f32.mrb[0].mxu0
    %v1656 = vadd.f32 0.0, %v1655
    %1657 = vmatprep.mubr.f32.mxu0 %v636
    %1658 = vmatmul.mubr.f32.gmra.mrb[0].mxu0 %v634
    %v1659 = vpop.f32.mrb[0].mxu0
    %v1660 = vadd.f32 0.0, %v1659
    %v1661 = vpop.f32.mrb[0].mxu0
    %v1662 = vadd.f32 0.0, %v1661
    %1663 = vmatprep.mubr.f32.mxu0 %v642
    %1664 = vmatmul.mubr.f32.gmra.mrb[0].mxu0 %v640
    %v1665 = vpop.f32.mrb[0].mxu0
    %v1666 = vadd.f32 0.0, %v1665
    %v1667 = vpop.f32.mrb[0].mxu0
    %v1668 = vadd.f32 0.0, %v1667
    %1669 = vmatprep.mubr.f32.mxu0 %v648
    %1670 = vmatmul.mubr.f32.gmra.mrb[0].mxu0 %v646
    %v1671 = vpop.f32.mrb[0].mxu0
    %v1672 = vadd.f32 0.0, %v1671
    %v1673 = vpop.f32.mrb[0].mxu0
    %v1674 = vadd.f32 0.0, %v1673
    %1675 = vmatprep.mubr.f32.mxu0 %v654
    %1676 = vmatmul.mubr.f32.gmra.mrb[0].mxu0 %v652
    %v1677 = vpop.f32.mrb[0].mxu0
    %v1678 = vadd.f32 0.0, %v1677
    %v1679 = vpop.f32.mrb[0].mxu0
    %v1680 = vadd.f32 0.0, %v1679
    %1681 = vmatprep.mubr.f32.mxu0 %v660
    %1682 = vmatmul.mubr.f32.gmra.mrb[0].mxu0 %v658
    %v1683 = vpop.f32.mrb[0].mxu0
    %v1684 = vadd.f32 0.0, %v1683
    %v1685 = vpop.f32.mrb[0].mxu0
    %v1686 = vadd.f32 0.0, %v1685
    %1687 = vmatprep.mubr.f32.mxu0 %v923
    %1688 = vmatmul.mubr.f32.gmra.mrb[0].mxu0 %v921
    %v1689 = vpop.f32.mrb[0].mxu0
    %v1690 = vadd.f32 0.0, %v1689
    %v1691 = vpop.f32.mrb[0].mxu0
    %v1692 = vadd.f32 0.0, %v1691
    %1693 = vmatprep.mubr.f32.mxu0 %v929
    %1694 = vmatmul.mubr.f32.gmra.mrb[0].mxu0 %v927
    %v1695 = vpop.f32.mrb[0].mxu0
    %v1696 = vadd.f32 0.0, %v1695
    %v1697 = vpop.f32.mrb[0].mxu0
    %v1698 = vadd.f32 0.0, %v1697
    %1699 = vmatprep.mubr.f32.mxu0 %v935
    %1700 = vmatmul.mubr.f32.gmra.mrb[0].mxu0 %v933
    %v1701 = vpop.f32.mrb[0].mxu0
    %v1702 = vadd.f32 0.0, %v1701
    %v1703 = vpop.f32.mrb[0].mxu0
    %v1704 = vadd.f32 0.0, %v1703
    %1705 = vmatprep.mubr.f32.mxu0 %v941
    %1706 = vmatmul.mubr.f32.gmra.mrb[0].mxu0 %v939
    %v1707 = vpop.f32.mrb[0].mxu0
    %v1708 = vadd.f32 0.0, %v1707
    %v1709 = vpop.f32.mrb[0].mxu0
    %v1710 = vadd.f32 0.0, %v1709
    %1711 = vmatprep.mubr.f32.mxu0 %v947
    %1712 = vmatmul.mubr.f32.gmra.mrb[0].mxu0 %v945
    %v1713 = vpop.f32.mrb[0].mxu0
    %v1714 = vadd.f32 0.0, %v1713
    %v1715 = vpop.f32.mrb[0].mxu0
    %v1716 = vadd.f32 0.0, %v1715
    %1717 = vmatprep.mubr.f32.mxu0 %v953
    %1718 = vmatmul.mubr.f32.gmra.mrb[0].mxu0 %v951
    %v1719 = vpop.f32.mrb[0].mxu0
    %v1720 = vadd.f32 0.0, %v1719
    %v1721 = vpop.f32.mrb[0].mxu0
    %v1722 = vadd.f32 0.0, %v1721
    %1723 = vmatprep.mubr.f32.mxu0 %v959
    %1724 = vmatmul.mubr.f32.gmra.mrb[0].mxu0 %v957
    %v1725 = vpop.f32.mrb[0].mxu0
    %v1726 = vadd.f32 0.0, %v1725
    %v1727 = vpop.f32.mrb[0].mxu0
    %v1728 = vadd.f32 0.0, %v1727
    %1729 = vmatprep.mubr.f32.mxu0 %v965
    %1730 = vmatmul.mubr.f32.gmra.mrb[0].mxu0 %v963
    %v1731 = vpop.f32.mrb[0].mxu0
    %v1732 = vadd.f32 0.0, %v1731
    %v1733 = vpop.f32.mrb[0].mxu0
    %v1734 = vadd.f32 0.0, %v1733
    %1735 = vmatprep.mubr.f32.mxu0 %v971
    %1736 = vmatmul.mubr.f32.gmra.mrb[0].mxu0 %v969
    %v1737 = vpop.f32.mrb[0].mxu0
    %v1738 = vadd.f32 0.0, %v1737
    %v1739 = vpop.f32.mrb[0].mxu0
    %v1740 = vadd.f32 0.0, %v1739
    %1741 = vmatprep.mubr.f32.mxu0 %v977
    %1742 = vmatmul.mubr.f32.gmra.mrb[0].mxu0 %v975
    %v1743 = vpop.f32.mrb[0].mxu0
    %v1744 = vadd.f32 0.0, %v1743
    %v1745 = vpop.f32.mrb[0].mxu0
    %v1746 = vadd.f32 0.0, %v1745
    %1747 = vmatprep.mubr.f32.mxu0 %v983
    %1748 = vmatmul.mubr.f32.gmra.mrb[0].mxu0 %v981
    %v1749 = vpop.f32.mrb[0].mxu0
    %v1750 = vadd.f32 0.0, %v1749
    %v1751 = vpop.f32.mrb[0].mxu0
    %v1752 = vadd.f32 0.0, %v1751
    %1753 = vmatprep.mubr.f32.mxu0 %v989
    %1754 = vmatmul.mubr.f32.gmra.mrb[0].mxu0 %v987
    %v1755 = vpop.f32.mrb[0].mxu0
    %v1756 = vadd.f32 0.0, %v1755
    %v1757 = vpop.f32.mrb[0].mxu0
    %v1758 = vadd.f32 0.0, %v1757
    %1759 = vmatprep.mubr.f32.mxu0 %v995
    %1760 = vmatmul.mubr.f32.gmra.mrb[0].mxu0 %v993
    %v1761 = vpop.f32.mrb[0].mxu0
    %v1762 = vadd.f32 0.0, %v1761
    %v1763 = vpop.f32.mrb[0].mxu0
    %v1764 = vadd.f32 0.0, %v1763
    %1765 = vmatprep.mubr.f32.mxu0 %v1001
    %1766 = vmatmul.mubr.f32.gmra.mrb[0].mxu0 %v999
    %v1767 = vpop.f32.mrb[0].mxu0
    %v1768 = vadd.f32 0.0, %v1767
    %v1769 = vpop.f32.mrb[0].mxu0
    %v1770 = vadd.f32 0.0, %v1769
    %1771 = vmatprep.mubr.f32.mxu0 %v1007
    %1772 = vmatmul.mubr.f32.gmra.mrb[0].mxu0 %v1005
    %v1773 = vpop.f32.mrb[0].mxu0
    %v1774 = vadd.f32 0.0, %v1773
    %v1775 = vpop.f32.mrb[0].mxu0
    %v1776 = vadd.f32 0.0, %v1775
    %1777 = vmatprep.mubr.f32.mxu0 %v1013
    %1778 = vmatmul.mubr.f32.gmra.mrb[0].mxu0 %v1011
    %v1779 = vpop.f32.mrb[0].mxu0
    %v1780 = vadd.f32 0.0, %v1779
    %v1781 = vpop.f32.mrb[0].mxu0
    %v1782 = vadd.f32 0.0, %v1781
    %1783 = vdwg.mxu0
    %v1784 = vld [vmem:[#allocation7] sm:$0xff]
    %v1785 = vld [vmem:[#allocation7 + $0x8] sm:$0xff]
    %v1786 = vld [vmem:[#allocation7 + $0x10] sm:$0xff]
    %v1787 = vld [vmem:[#allocation7 + $0x18] sm:$0xff]
    %v1788 = vld [vmem:[#allocation7 + $0x20] sm:$0xff]
    %v1789 = vld [vmem:[#allocation7 + $0x28] sm:$0xff]
    %v1790 = vld [vmem:[#allocation7 + $0x30] sm:$0xff]
    %v1791 = vld [vmem:[#allocation7 + $0x38] sm:$0xff]
    %v1792 = vld [vmem:[#allocation7 + $0x40] sm:$0xff]
    %v1793 = vld [vmem:[#allocation7 + $0x48] sm:$0xff]
    %v1794 = vld [vmem:[#allocation7 + $0x50] sm:$0xff]
    %v1795 = vld [vmem:[#allocation7 + $0x58] sm:$0xff]
    %v1796 = vld [vmem:[#allocation7 + $0x60] sm:$0xff]
    %v1797 = vld [vmem:[#allocation7 + $0x68] sm:$0xff]
    %v1798 = vld [vmem:[#allocation7 + $0x70] sm:$0xff]
    %v1799 = vld [vmem:[#allocation7 + $0x78] sm:$0xff]
    %v1800 = vld [vmem:[#allocation7 + $0x80] sm:$0xff]
    %v1801 = vld [vmem:[#allocation7 + $0x88] sm:$0xff]
    %v1802 = vld [vmem:[#allocation7 + $0x90] sm:$0xff]
    %v1803 = vld [vmem:[#allocation7 + $0x98] sm:$0xff]
    %v1804 = vld [vmem:[#allocation7 + $0xa0] sm:$0xff]
    %v1805 = vld [vmem:[#allocation7 + $0xa8] sm:$0xff]
    %v1806 = vld [vmem:[#allocation7 + $0xb0] sm:$0xff]
    %v1807 = vld [vmem:[#allocation7 + $0xb8] sm:$0xff]
    %v1808 = vld [vmem:[#allocation7 + $0xc0] sm:$0xff]
    %v1809 = vld [vmem:[#allocation7 + $0xc8] sm:$0xff]
    %v1810 = vld [vmem:[#allocation7 + $0xd0] sm:$0xff]
    %v1811 = vld [vmem:[#allocation7 + $0xd8] sm:$0xff]
    %v1812 = vld [vmem:[#allocation7 + $0xe0] sm:$0xff]
    %v1813 = vld [vmem:[#allocation7 + $0xe8] sm:$0xff]
    %v1814 = vld [vmem:[#allocation7 + $0xf0] sm:$0xff]
    %v1815 = vld [vmem:[#allocation7 + $0xf8] sm:$0xff]
    %v1816 = vld [vmem:[#allocation7 + $0x100] sm:$0xff]
    %v1817 = vld [vmem:[#allocation7 + $0x108] sm:$0xff]
    %v1818 = vld [vmem:[#allocation7 + $0x110] sm:$0xff]
    %v1819 = vld [vmem:[#allocation7 + $0x118] sm:$0xff]
    %v1820 = vld [vmem:[#allocation7 + $0x120] sm:$0xff]
    %v1821 = vld [vmem:[#allocation7 + $0x128] sm:$0xff]
    %v1822 = vld [vmem:[#allocation7 + $0x130] sm:$0xff]
    %v1823 = vld [vmem:[#allocation7 + $0x138] sm:$0xff]
    %v1824 = vld [vmem:[#allocation7 + $0x140] sm:$0xff]
    %v1825 = vld [vmem:[#allocation7 + $0x148] sm:$0xff]
    %v1826 = vld [vmem:[#allocation7 + $0x150] sm:$0xff]
    %v1827 = vld [vmem:[#allocation7 + $0x158] sm:$0xff]
    %v1828 = vld [vmem:[#allocation7 + $0x160] sm:$0xff]
    %v1829 = vld [vmem:[#allocation7 + $0x168] sm:$0xff]
    %v1830 = vld [vmem:[#allocation7 + $0x170] sm:$0xff]
    %v1831 = vld [vmem:[#allocation7 + $0x178] sm:$0xff]
    %v1832 = vld [vmem:[#allocation7 + $0x180] sm:$0xff]
    %v1833 = vld [vmem:[#allocation7 + $0x188] sm:$0xff]
    %v1834 = vld [vmem:[#allocation7 + $0x190] sm:$0xff]
    %v1835 = vld [vmem:[#allocation7 + $0x198] sm:$0xff]
    %v1836 = vld [vmem:[#allocation7 + $0x1a0] sm:$0xff]
    %v1837 = vld [vmem:[#allocation7 + $0x1a8] sm:$0xff]
    %v1838 = vld [vmem:[#allocation7 + $0x1b0] sm:$0xff]
    %v1839 = vld [vmem:[#allocation7 + $0x1b8] sm:$0xff]
    %v1840 = vld [vmem:[#allocation7 + $0x1c0] sm:$0xff]
    %v1841 = vld [vmem:[#allocation7 + $0x1c8] sm:$0xff]
    %v1842 = vld [vmem:[#allocation7 + $0x1d0] sm:$0xff]
    %v1843 = vld [vmem:[#allocation7 + $0x1d8] sm:$0xff]
    %v1844 = vld [vmem:[#allocation7 + $0x1e0] sm:$0xff]
    %v1845 = vld [vmem:[#allocation7 + $0x1e8] sm:$0xff]
    %v1846 = vld [vmem:[#allocation7 + $0x1f0] sm:$0xff]
    %v1847 = vld [vmem:[#allocation7 + $0x1f8] sm:$0xff]
    %v1848 = vmul.f32 %v1594, %v1784
    %v1849 = vmul.f32 %v1596, %v1785
    %v1850 = vmul.f32 %v1600, %v1786
    %v1851 = vmul.f32 %v1602, %v1787
    %v1852 = vmul.f32 %v1606, %v1788
    %v1853 = vmul.f32 %v1608, %v1789
    %v1854 = vmul.f32 %v1612, %v1790
    %v1855 = vmul.f32 %v1614, %v1791
    %v1856 = vmul.f32 %v1618, %v1792
    %v1857 = vmul.f32 %v1620, %v1793
    %v1858 = vmul.f32 %v1624, %v1794
    %v1859 = vmul.f32 %v1626, %v1795
    %v1860 = vmul.f32 %v1630, %v1796
    %v1861 = vmul.f32 %v1632, %v1797
    %v1862 = vmul.f32 %v1636, %v1798
    %v1863 = vmul.f32 %v1638, %v1799
    %v1864 = vmul.f32 %v1642, %v1800
    %v1865 = vmul.f32 %v1644, %v1801
    %v1866 = vmul.f32 %v1648, %v1802
    %v1867 = vmul.f32 %v1650, %v1803
    %v1868 = vmul.f32 %v1654, %v1804
    %v1869 = vmul.f32 %v1656, %v1805
    %v1870 = vmul.f32 %v1660, %v1806
    %v1871 = vmul.f32 %v1662, %v1807
    %v1872 = vmul.f32 %v1666, %v1808
    %v1873 = vmul.f32 %v1668, %v1809
    %v1874 = vmul.f32 %v1672, %v1810
    %v1875 = vmul.f32 %v1674, %v1811
    %v1876 = vmul.f32 %v1678, %v1812
    %v1877 = vmul.f32 %v1680, %v1813
    %v1878 = vmul.f32 %v1684, %v1814
    %v1879 = vmul.f32 %v1686, %v1815
    %v1880 = vmul.f32 %v1690, %v1816
    %v1881 = vmul.f32 %v1692, %v1817
    %v1882 = vmul.f32 %v1696, %v1818
    %v1883 = vmul.f32 %v1698, %v1819
    %v1884 = vmul.f32 %v1702, %v1820
    %v1885 = vmul.f32 %v1704, %v1821
    %v1886 = vmul.f32 %v1708, %v1822
    %v1887 = vmul.f32 %v1710, %v1823
    %v1888 = vmul.f32 %v1714, %v1824
    %v1889 = vmul.f32 %v1716, %v1825
    %v1890 = vmul.f32 %v1720, %v1826
    %v1891 = vmul.f32 %v1722, %v1827
    %v1892 = vmul.f32 %v1726, %v1828
    %v1893 = vmul.f32 %v1728, %v1829
    %v1894 = vmul.f32 %v1732, %v1830
    %v1895 = vmul.f32 %v1734, %v1831
    %v1896 = vmul.f32 %v1738, %v1832
    %v1897 = vmul.f32 %v1740, %v1833
    %v1898 = vmul.f32 %v1744, %v1834
    %v1899 = vmul.f32 %v1746, %v1835
    %v1900 = vmul.f32 %v1750, %v1836
    %v1901 = vmul.f32 %v1752, %v1837
    %v1902 = vmul.f32 %v1756, %v1838
    %v1903 = vmul.f32 %v1758, %v1839
    %v1904 = vmul.f32 %v1762, %v1840
    %v1905 = vmul.f32 %v1764, %v1841
    %v1906 = vmul.f32 %v1768, %v1842
    %v1907 = vmul.f32 %v1770, %v1843
    %v1908 = vmul.f32 %v1774, %v1844
    %v1909 = vmul.f32 %v1776, %v1845
    %v1910 = vmul.f32 %v1780, %v1846
    %v1911 = vmul.f32 %v1782, %v1847
    %1912 = vmatprep.subr.mxu0 %v378
    %1913 = vmatpush1.msra.mxu0 %v376
    %1914 = vmatprep.subr.mxu0 %v384
    %1915 = vmatpush1.msra.mxu0 %v382
    %1916 = vmatprep.subr.mxu0 %v390
    %1917 = vmatpush1.msra.mxu0 %v388
    %1918 = vmatprep.subr.mxu0 %v396
    %1919 = vmatpush1.msra.mxu0 %v394
    %1920 = vmatprep.subr.mxu0 %v402
    %1921 = vmatpush1.msra.mxu0 %v400
    %1922 = vmatprep.subr.mxu0 %v408
    %1923 = vmatpush1.msra.mxu0 %v406
    %1924 = vmatprep.subr.mxu0 %v414
    %1925 = vmatpush1.msra.mxu0 %v412
    %1926 = vmatprep.subr.mxu0 %v420
    %1927 = vmatpush1.msra.mxu0 %v418
    %1928 = vmatprep.subr.mxu0 %v426
    %1929 = vmatpush1.msra.mxu0 %v424
    %1930 = vmatprep.subr.mxu0 %v432
    %1931 = vmatpush1.msra.mxu0 %v430
    %1932 = vmatprep.subr.mxu0 %v438
    %1933 = vmatpush1.msra.mxu0 %v436
    %1934 = vmatprep.subr.mxu0 %v444
    %1935 = vmatpush1.msra.mxu0 %v442
    %1936 = vmatprep.subr.mxu0 %v450
    %1937 = vmatpush1.msra.mxu0 %v448
    %1938 = vmatprep.subr.mxu0 %v456
    %1939 = vmatpush1.msra.mxu0 %v454
    %1940 = vmatprep.subr.mxu0 %v462
    %1941 = vmatpush1.msra.mxu0 %v460
    %1942 = vmatprep.subr.mxu0 %v468
    %1943 = vmatpush1.msra.mxu0 %v466
    %1944 = vmatprep.subr.mxu0 %v731
    %1945 = vmatpush1.msra.mxu0 %v729
    %1946 = vmatprep.subr.mxu0 %v737
    %1947 = vmatpush1.msra.mxu0 %v735
    %1948 = vmatprep.subr.mxu0 %v743
    %1949 = vmatpush1.msra.mxu0 %v741
    %1950 = vmatprep.subr.mxu0 %v749
    %1951 = vmatpush1.msra.mxu0 %v747
    %1952 = vmatprep.subr.mxu0 %v755
    %1953 = vmatpush1.msra.mxu0 %v753
    %1954 = vmatprep.subr.mxu0 %v761
    %1955 = vmatpush1.msra.mxu0 %v759
    %1956 = vmatprep.subr.mxu0 %v767
    %1957 = vmatpush1.msra.mxu0 %v765
    %1958 = vmatprep.subr.mxu0 %v773
    %1959 = vmatpush1.msra.mxu0 %v771
    %1960 = vmatprep.subr.mxu0 %v779
    %1961 = vmatpush1.msra.mxu0 %v777
    %1962 = vmatprep.subr.mxu0 %v785
    %1963 = vmatpush1.msra.mxu0 %v783
    %1964 = vmatprep.subr.mxu0 %v791
    %1965 = vmatpush1.msra.mxu0 %v789
    %1966 = vmatprep.subr.mxu0 %v797
    %1967 = vmatpush1.msra.mxu0 %v795
    %1968 = vmatprep.subr.mxu0 %v803
    %1969 = vmatpush1.msra.mxu0 %v801
    %1970 = vmatprep.subr.mxu0 %v809
    %1971 = vmatpush1.msra.mxu0 %v807
    %1972 = vmatprep.subr.mxu0 %v815
    %1973 = vmatpush1.msra.mxu0 %v813
    %1974 = vmatprep.subr.mxu0 %v821
    %1975 = vmatpush1.msra.mxu0 %v819
    %1976 = vmatprep.mubr.f32.mxu0 %v1849
    %1977 = vmatmul.mubr.f32.gmra.mrb[0].mxu0 %v1848
    %v1978 = vpop.f32.mrb[0].mxu0
    %v1979 = vadd.f32 0.0, %v1978
    %v1980 = vpop.f32.mrb[0].mxu0
    %v1981 = vadd.f32 0.0, %v1980
    %1982 = vmatprep.mubr.f32.mxu0 %v1851
    %1983 = vmatmul.mubr.f32.gmra.mrb[0].mxu0 %v1850
    %v1984 = vpop.f32.mrb[0].mxu0
    %v1985 = vadd.f32 0.0, %v1984
    %v1986 = vpop.f32.mrb[0].mxu0
    %v1987 = vadd.f32 0.0, %v1986
    %1988 = vmatprep.mubr.f32.mxu0 %v1853
    %1989 = vmatmul.mubr.f32.gmra.mrb[0].mxu0 %v1852
    %v1990 = vpop.f32.mrb[0].mxu0
    %v1991 = vadd.f32 0.0, %v1990
    %v1992 = vpop.f32.mrb[0].mxu0
    %v1993 = vadd.f32 0.0, %v1992
    %1994 = vmatprep.mubr.f32.mxu0 %v1855
    %1995 = vmatmul.mubr.f32.gmra.mrb[0].mxu0 %v1854
    %v1996 = vpop.f32.mrb[0].mxu0
    %v1997 = vadd.f32 0.0, %v1996
    %v1998 = vpop.f32.mrb[0].mxu0
    %v1999 = vadd.f32 0.0, %v1998
    %2000 = vmatprep.mubr.f32.mxu0 %v1857
    %2001 = vmatmul.mubr.f32.gmra.mrb[0].mxu0 %v1856
    %v2002 = vpop.f32.mrb[0].mxu0
    %v2003 = vadd.f32 0.0, %v2002
    %v2004 = vpop.f32.mrb[0].mxu0
    %v2005 = vadd.f32 0.0, %v2004
    %2006 = vmatprep.mubr.f32.mxu0 %v1859
    %2007 = vmatmul.mubr.f32.gmra.mrb[0].mxu0 %v1858
    %v2008 = vpop.f32.mrb[0].mxu0
    %v2009 = vadd.f32 0.0, %v2008
    %v2010 = vpop.f32.mrb[0].mxu0
    %v2011 = vadd.f32 0.0, %v2010
    %2012 = vmatprep.mubr.f32.mxu0 %v1861
    %2013 = vmatmul.mubr.f32.gmra.mrb[0].mxu0 %v1860
    %v2014 = vpop.f32.mrb[0].mxu0
    %v2015 = vadd.f32 0.0, %v2014
    %v2016 = vpop.f32.mrb[0].mxu0
    %v2017 = vadd.f32 0.0, %v2016
    %2018 = vmatprep.mubr.f32.mxu0 %v1863
    %2019 = vmatmul.mubr.f32.gmra.mrb[0].mxu0 %v1862
    %v2020 = vpop.f32.mrb[0].mxu0
    %v2021 = vadd.f32 0.0, %v2020
    %v2022 = vpop.f32.mrb[0].mxu0
    %v2023 = vadd.f32 0.0, %v2022
    %2024 = vmatprep.mubr.f32.mxu0 %v1865
    %2025 = vmatmul.mubr.f32.gmra.mrb[0].mxu0 %v1864
    %v2026 = vpop.f32.mrb[0].mxu0
    %v2027 = vadd.f32 0.0, %v2026
    %v2028 = vpop.f32.mrb[0].mxu0
    %v2029 = vadd.f32 0.0, %v2028
    %2030 = vmatprep.mubr.f32.mxu0 %v1867
    %2031 = vmatmul.mubr.f32.gmra.mrb[0].mxu0 %v1866
    %v2032 = vpop.f32.mrb[0].mxu0
    %v2033 = vadd.f32 0.0, %v2032
    %v2034 = vpop.f32.mrb[0].mxu0
    %v2035 = vadd.f32 0.0, %v2034
    %2036 = vmatprep.mubr.f32.mxu0 %v1869
    %2037 = vmatmul.mubr.f32.gmra.mrb[0].mxu0 %v1868
    %v2038 = vpop.f32.mrb[0].mxu0
    %v2039 = vadd.f32 0.0, %v2038
    %v2040 = vpop.f32.mrb[0].mxu0
    %v2041 = vadd.f32 0.0, %v2040
    %2042 = vmatprep.mubr.f32.mxu0 %v1871
    %2043 = vmatmul.mubr.f32.gmra.mrb[0].mxu0 %v1870
    %v2044 = vpop.f32.mrb[0].mxu0
    %v2045 = vadd.f32 0.0, %v2044
    %v2046 = vpop.f32.mrb[0].mxu0
    %v2047 = vadd.f32 0.0, %v2046
    %2048 = vmatprep.mubr.f32.mxu0 %v1873
    %2049 = vmatmul.mubr.f32.gmra.mrb[0].mxu0 %v1872
    %v2050 = vpop.f32.mrb[0].mxu0
    %v2051 = vadd.f32 0.0, %v2050
    %v2052 = vpop.f32.mrb[0].mxu0
    %v2053 = vadd.f32 0.0, %v2052
    %2054 = vmatprep.mubr.f32.mxu0 %v1875
    %2055 = vmatmul.mubr.f32.gmra.mrb[0].mxu0 %v1874
    %v2056 = vpop.f32.mrb[0].mxu0
    %v2057 = vadd.f32 0.0, %v2056
    %v2058 = vpop.f32.mrb[0].mxu0
    %v2059 = vadd.f32 0.0, %v2058
    %2060 = vmatprep.mubr.f32.mxu0 %v1877
    %2061 = vmatmul.mubr.f32.gmra.mrb[0].mxu0 %v1876
    %v2062 = vpop.f32.mrb[0].mxu0
    %v2063 = vadd.f32 0.0, %v2062
    %v2064 = vpop.f32.mrb[0].mxu0
    %v2065 = vadd.f32 0.0, %v2064
    %2066 = vmatprep.mubr.f32.mxu0 %v1879
    %2067 = vmatmul.mubr.f32.gmra.mrb[0].mxu0 %v1878
    %v2068 = vpop.f32.mrb[0].mxu0
    %v2069 = vadd.f32 0.0, %v2068
    %v2070 = vpop.f32.mrb[0].mxu0
    %v2071 = vadd.f32 0.0, %v2070
    %2072 = vmatprep.mubr.f32.mxu0 %v1881
    %2073 = vmatmul.mubr.f32.gmra.mrb[0].mxu0 %v1880
    %v2074 = vpop.f32.mrb[0].mxu0
    %v2075 = vadd.f32 0.0, %v2074
    %v2076 = vpop.f32.mrb[0].mxu0
    %v2077 = vadd.f32 0.0, %v2076
    %2078 = vmatprep.mubr.f32.mxu0 %v1883
    %2079 = vmatmul.mubr.f32.gmra.mrb[0].mxu0 %v1882
    %v2080 = vpop.f32.mrb[0].mxu0
    %v2081 = vadd.f32 0.0, %v2080
    %v2082 = vpop.f32.mrb[0].mxu0
    %v2083 = vadd.f32 0.0, %v2082
    %2084 = vmatprep.mubr.f32.mxu0 %v1885
    %2085 = vmatmul.mubr.f32.gmra.mrb[0].mxu0 %v1884
    %v2086 = vpop.f32.mrb[0].mxu0
    %v2087 = vadd.f32 0.0, %v2086
    %v2088 = vpop.f32.mrb[0].mxu0
    %v2089 = vadd.f32 0.0, %v2088
    %2090 = vmatprep.mubr.f32.mxu0 %v1887
    %2091 = vmatmul.mubr.f32.gmra.mrb[0].mxu0 %v1886
    %v2092 = vpop.f32.mrb[0].mxu0
    %v2093 = vadd.f32 0.0, %v2092
    %v2094 = vpop.f32.mrb[0].mxu0
    %v2095 = vadd.f32 0.0, %v2094
    %2096 = vmatprep.mubr.f32.mxu0 %v1889
    %2097 = vmatmul.mubr.f32.gmra.mrb[0].mxu0 %v1888
    %v2098 = vpop.f32.mrb[0].mxu0
    %v2099 = vadd.f32 0.0, %v2098
    %v2100 = vpop.f32.mrb[0].mxu0
    %v2101 = vadd.f32 0.0, %v2100
    %2102 = vmatprep.mubr.f32.mxu0 %v1891
    %2103 = vmatmul.mubr.f32.gmra.mrb[0].mxu0 %v1890
    %v2104 = vpop.f32.mrb[0].mxu0
    %v2105 = vadd.f32 0.0, %v2104
    %v2106 = vpop.f32.mrb[0].mxu0
    %v2107 = vadd.f32 0.0, %v2106
    %2108 = vmatprep.mubr.f32.mxu0 %v1893
    %2109 = vmatmul.mubr.f32.gmra.mrb[0].mxu0 %v1892
    %v2110 = vpop.f32.mrb[0].mxu0
    %v2111 = vadd.f32 0.0, %v2110
    %v2112 = vpop.f32.mrb[0].mxu0
    %v2113 = vadd.f32 0.0, %v2112
    %2114 = vmatprep.mubr.f32.mxu0 %v1895
    %2115 = vmatmul.mubr.f32.gmra.mrb[0].mxu0 %v1894
    %v2116 = vpop.f32.mrb[0].mxu0
    %v2117 = vadd.f32 0.0, %v2116
    %v2118 = vpop.f32.mrb[0].mxu0
    %v2119 = vadd.f32 0.0, %v2118
    %2120 = vmatprep.mubr.f32.mxu0 %v1897
    %2121 = vmatmul.mubr.f32.gmra.mrb[0].mxu0 %v1896
    %v2122 = vpop.f32.mrb[0].mxu0
    %v2123 = vadd.f32 0.0, %v2122
    %v2124 = vpop.f32.mrb[0].mxu0
    %v2125 = vadd.f32 0.0, %v2124
    %2126 = vmatprep.mubr.f32.mxu0 %v1899
    %2127 = vmatmul.mubr.f32.gmra.mrb[0].mxu0 %v1898
    %v2128 = vpop.f32.mrb[0].mxu0
    %v2129 = vadd.f32 0.0, %v2128
    %v2130 = vpop.f32.mrb[0].mxu0
    %v2131 = vadd.f32 0.0, %v2130
    %2132 = vmatprep.mubr.f32.mxu0 %v1901
    %2133 = vmatmul.mubr.f32.gmra.mrb[0].mxu0 %v1900
    %v2134 = vpop.f32.mrb[0].mxu0
    %v2135 = vadd.f32 0.0, %v2134
    %v2136 = vpop.f32.mrb[0].mxu0
    %v2137 = vadd.f32 0.0, %v2136
    %2138 = vmatprep.mubr.f32.mxu0 %v1903
    %2139 = vmatmul.mubr.f32.gmra.mrb[0].mxu0 %v1902
    %v2140 = vpop.f32.mrb[0].mxu0
    %v2141 = vadd.f32 0.0, %v2140
    %v2142 = vpop.f32.mrb[0].mxu0
    %v2143 = vadd.f32 0.0, %v2142
    %2144 = vmatprep.mubr.f32.mxu0 %v1905
    %2145 = vmatmul.mubr.f32.gmra.mrb[0].mxu0 %v1904
    %v2146 = vpop.f32.mrb[0].mxu0
    %v2147 = vadd.f32 0.0, %v2146
    %v2148 = vpop.f32.mrb[0].mxu0
    %v2149 = vadd.f32 0.0, %v2148
    %2150 = vmatprep.mubr.f32.mxu0 %v1907
    %2151 = vmatmul.mubr.f32.gmra.mrb[0].mxu0 %v1906
    %v2152 = vpop.f32.mrb[0].mxu0
    %v2153 = vadd.f32 0.0, %v2152
    %v2154 = vpop.f32.mrb[0].mxu0
    %v2155 = vadd.f32 0.0, %v2154
    %2156 = vmatprep.mubr.f32.mxu0 %v1909
    %2157 = vmatmul.mubr.f32.gmra.mrb[0].mxu0 %v1908
    %v2158 = vpop.f32.mrb[0].mxu0
    %v2159 = vadd.f32 0.0, %v2158
    %v2160 = vpop.f32.mrb[0].mxu0
    %v2161 = vadd.f32 0.0, %v2160
    %2162 = vmatprep.mubr.f32.mxu0 %v1911
    %2163 = vmatmul.mubr.f32.gmra.mrb[0].mxu0 %v1910
    %v2164 = vpop.f32.mrb[0].mxu0
    %v2165 = vadd.f32 0.0, %v2164
    %v2166 = vpop.f32.mrb[0].mxu0
    %v2167 = vadd.f32 0.0, %v2166
    %2168 = vdwg.mxu0
    %v2169 = vld [vmem:[%s2] sm:$0xff]
    %v2170 = vld [vmem:[%s3] sm:$0xff]
    %2172 = vset.pattern.permute.xlu0 0
    %2173 = vperm.xlu0 %2172, %v2170
    %v2174 = vpop.permute.xlu0 %2173
    %2176 = vmatprep.subr.mxu0 %v1981
    %2177 = vmatpush1.msra.mxu0 %v1979
    %2178 = vmatprep.subr.mxu0 %v1987
    %2179 = vmatpush1.msra.mxu0 %v1985
    %2180 = vmatprep.subr.mxu0 %v1993
    %2181 = vmatpush1.msra.mxu0 %v1991
    %2182 = vmatprep.subr.mxu0 %v1999
    %2183 = vmatpush1.msra.mxu0 %v1997
    %2184 = vmatprep.subr.mxu0 %v2005
    %2185 = vmatpush1.msra.mxu0 %v2003
    %2186 = vmatprep.subr.mxu0 %v2011
    %2187 = vmatpush1.msra.mxu0 %v2009
    %2188 = vmatprep.subr.mxu0 %v2017
    %2189 = vmatpush1.msra.mxu0 %v2015
    %2190 = vmatprep.subr.mxu0 %v2023
    %2191 = vmatpush1.msra.mxu0 %v2021
    %2192 = vmatprep.subr.mxu0 %v2029
    %2193 = vmatpush1.msra.mxu0 %v2027
    %2194 = vmatprep.subr.mxu0 %v2035
    %2195 = vmatpush1.msra.mxu0 %v2033
    %2196 = vmatprep.subr.mxu0 %v2041
    %2197 = vmatpush1.msra.mxu0 %v2039
    %2198 = vmatprep.subr.mxu0 %v2047
    %2199 = vmatpush1.msra.mxu0 %v2045
    %2200 = vmatprep.subr.mxu0 %v2053
    %2201 = vmatpush1.msra.mxu0 %v2051
    %2202 = vmatprep.subr.mxu0 %v2059
    %2203 = vmatpush1.msra.mxu0 %v2057
    %2204 = vmatprep.subr.mxu0 %v2065
    %2205 = vmatpush1.msra.mxu0 %v2063
    %2206 = vmatprep.subr.mxu0 %v2071
    %2207 = vmatpush1.msra.mxu0 %v2069
    %2208 = vmatprep.subr.mxu0 0.0
    %2209 = vmatpush1.msra.mxu0 0.0
    %2210 = vmatprep.subr.mxu0 0.0
    %2211 = vmatpush1.msra.mxu0 0.0
    %2212 = vmatprep.subr.mxu0 0.0
    %2213 = vmatpush1.msra.mxu0 0.0
    %2214 = vmatprep.subr.mxu0 0.0
    %2215 = vmatpush1.msra.mxu0 0.0
    %2216 = vmatprep.subr.mxu0 0.0
    %2217 = vmatpush1.msra.mxu0 0.0
    %2218 = vmatprep.subr.mxu0 0.0
    %2219 = vmatpush1.msra.mxu0 0.0
    %2220 = vmatprep.subr.mxu0 0.0
    %2221 = vmatpush1.msra.mxu0 0.0
    %2222 = vmatprep.subr.mxu0 0.0
    %2223 = vmatpush1.msra.mxu0 0.0
    %2224 = vmatprep.subr.mxu0 0.0
    %2225 = vmatpush1.msra.mxu0 0.0
    %2226 = vmatprep.subr.mxu0 0.0
    %2227 = vmatpush1.msra.mxu0 0.0
    %2228 = vmatprep.subr.mxu0 0.0
    %2229 = vmatpush1.msra.mxu0 0.0
    %2230 = vmatprep.subr.mxu0 0.0
    %2231 = vmatpush1.msra.mxu0 0.0
    %2232 = vmatprep.subr.mxu0 0.0
    %2233 = vmatpush1.msra.mxu0 0.0
    %2234 = vmatprep.subr.mxu0 0.0
    %2235 = vmatpush1.msra.mxu0 0.0
    %2236 = vmatprep.subr.mxu0 0.0
    %2237 = vmatpush1.msra.mxu0 0.0
    %2238 = vmatprep.subr.mxu0 0.0
    %2239 = vmatpush1.msra.mxu0 0.0
    %2240 = vmatprep.mubr.f32.mxu0 0.0
    %2241 = vmatmul.mubr.f32.gmra.mrb[0].mxu0 %v2169
    %v2242 = vpop.f32.mrb[0].mxu0
    %v2243 = vadd.f32 %v2174, %v2242
    %v2244 = vpop.f32.mrb[0].mxu0
    %v2245 = vadd.f32 %v2174, %v2244
    %2246 = vdwg.mxu0
    %2247 = vst [vmem:[#allocation8] sm:$0xff] %v2243
    %2248 = vst [vmem:[#allocation8 + $0x8] sm:$0xff] %v2245
    %2249 = vmatprep.subr.mxu0 %v2077
    %2250 = vmatpush1.msra.mxu0 %v2075
    %2251 = vmatprep.subr.mxu0 %v2083
    %2252 = vmatpush1.msra.mxu0 %v2081
    %2253 = vmatprep.subr.mxu0 %v2089
    %2254 = vmatpush1.msra.mxu0 %v2087
    %2255 = vmatprep.subr.mxu0 %v2095
    %2256 = vmatpush1.msra.mxu0 %v2093
    %2257 = vmatprep.subr.mxu0 %v2101
    %2258 = vmatpush1.msra.mxu0 %v2099
    %2259 = vmatprep.subr.mxu0 %v2107
    %2260 = vmatpush1.msra.mxu0 %v2105
    %2261 = vmatprep.subr.mxu0 %v2113
    %2262 = vmatpush1.msra.mxu0 %v2111
    %2263 = vmatprep.subr.mxu0 %v2119
    %2264 = vmatpush1.msra.mxu0 %v2117
    %2265 = vmatprep.subr.mxu0 %v2125
    %2266 = vmatpush1.msra.mxu0 %v2123
    %2267 = vmatprep.subr.mxu0 %v2131
    %2268 = vmatpush1.msra.mxu0 %v2129
    %2269 = vmatprep.subr.mxu0 %v2137
    %2270 = vmatpush1.msra.mxu0 %v2135
    %2271 = vmatprep.subr.mxu0 %v2143
    %2272 = vmatpush1.msra.mxu0 %v2141
    %2273 = vmatprep.subr.mxu0 %v2149
    %2274 = vmatpush1.msra.mxu0 %v2147
    %2275 = vmatprep.subr.mxu0 %v2155
    %2276 = vmatpush1.msra.mxu0 %v2153
    %2277 = vmatprep.subr.mxu0 %v2161
    %2278 = vmatpush1.msra.mxu0 %v2159
    %2279 = vmatprep.subr.mxu0 %v2167
    %2280 = vmatpush1.msra.mxu0 %v2165
    %2281 = vmatprep.subr.mxu0 0.0
    %2282 = vmatpush1.msra.mxu0 0.0
    %2283 = vmatprep.subr.mxu0 0.0
    %2284 = vmatpush1.msra.mxu0 0.0
    %2285 = vmatprep.subr.mxu0 0.0
    %2286 = vmatpush1.msra.mxu0 0.0
    %2287 = vmatprep.subr.mxu0 0.0
    %2288 = vmatpush1.msra.mxu0 0.0
    %2289 = vmatprep.subr.mxu0 0.0
    %2290 = vmatpush1.msra.mxu0 0.0
    %2291 = vmatprep.subr.mxu0 0.0
    %2292 = vmatpush1.msra.mxu0 0.0
    %2293 = vmatprep.subr.mxu0 0.0
    %2294 = vmatpush1.msra.mxu0 0.0
    %2295 = vmatprep.subr.mxu0 0.0
    %2296 = vmatpush1.msra.mxu0 0.0
    %2297 = vmatprep.subr.mxu0 0.0
    %2298 = vmatpush1.msra.mxu0 0.0
    %2299 = vmatprep.subr.mxu0 0.0
    %2300 = vmatpush1.msra.mxu0 0.0
    %2301 = vmatprep.subr.mxu0 0.0
    %2302 = vmatpush1.msra.mxu0 0.0
    %2303 = vmatprep.subr.mxu0 0.0
    %2304 = vmatpush1.msra.mxu0 0.0
    %2305 = vmatprep.subr.mxu0 0.0
    %2306 = vmatpush1.msra.mxu0 0.0
    %2307 = vmatprep.subr.mxu0 0.0
    %2308 = vmatpush1.msra.mxu0 0.0
    %2309 = vmatprep.subr.mxu0 0.0
    %2310 = vmatpush1.msra.mxu0 0.0
    %2311 = vmatprep.subr.mxu0 0.0
    %2312 = vmatpush1.msra.mxu0 0.0
    %2313 = vmatprep.mubr.f32.mxu0 0.0
    %2314 = vmatmul.mubr.f32.gmra.mrb[0].mxu0 %v2169
    %v2315 = vpop.f32.mrb[0].mxu0
    %v2316 = vadd.f32 %v2174, %v2315
    %v2317 = vpop.f32.mrb[0].mxu0
    %v2318 = vadd.f32 %v2174, %v2317
    %2319 = vdwg.mxu0
    %s2320 = scalar_lea.vmem [#allocation8], 16
    %2321 = vst [vmem:[%s2320] sm:$0xff] %v2316
    %2322 = vst [vmem:[%s2320 + $0x8] sm:$0xff] %v2318
    // Predicated region
    $region34: #{tpu_custom_call.1} parent=1 // pred_check
      _
    $region35: #{tpu_custom_call.1} parent=1 // pred_check_branch
      %2324 = sbr.rel (0) target = $region37
    $region36: #{tpu_custom_call.1} parent=1 // pred_region
      %s2326 = ssub.s32 512, 512
      %2327 = vsyncadd [#allocation4], %s2326
      %s2328 = sshll.u32 [#allocation8], 4
      %s2329 = int_to_ptr.vmem [resolvable:$true] %s2328
      %2334 = dma.vmem_to_hbm [thread:$0]  %s2329, 512, %s5, [#allocation4], 256, 256, 16
    $region37: #{tpu_custom_call.1} parent=1 // pred_fallthru
      _
    // Predicated region
    $region38: #{tpu_custom_call.1} parent=1 // pred_check
      _
    $region39: #{tpu_custom_call.1} parent=1 // pred_check_branch
      %2336 = sbr.rel (0) target = $region41
    $region40: #{tpu_custom_call.1} parent=1 // pred_region
      %2337 = dma.done [#allocation4], 512
    $region41: #{tpu_custom_call.1} parent=1 // pred_fallthru
      _
    %2338 = vsyncpa [#allocation3], 1
    %2339 = vsyncpa [#allocation6], 1
    %2340 = vsyncpa [#allocation4], 1

</llo_original>
